<compile_context>
chip_gen: v7x
topology: tpu7x:2x2x1
jax: 0.10.0
libtpu: 0.0.40
codegen_flags: <defaults>
</compile_context>

<pallas_src>
import functools

import jax
import jax.numpy as jnp
from jax.experimental import pallas as pl
from jax.experimental.pallas import tpu as pltpu


def _round_up(x, m):
    return (x + m - 1) // m * m


def _pick_band_rows(H_out, W_out, C_out_p, K_flat, in_itemsize,
                    target_bytes=4 << 20):
    """Largest divisor TH of H_out whose per-band live set (double-buffered
    output tile + patch matrix + f32 dot result) fits the VMEM budget.
    Bands must keep the output block sublane-aligned (TH*W_out % 8 == 0)."""
    valid = [th for th in range(1, H_out + 1)
             if H_out % th == 0 and (th == H_out or (th * W_out) % 8 == 0)]

    def band_bytes(th):
        m = th * W_out
        return m * (2 * C_out_p * 4 + K_flat * in_itemsize + C_out_p * 4)

    under = [th for th in valid if band_bytes(th) <= target_bytes]
    return max(under) if under else min(valid)


def _conv_kernel(x_ref, w_ref, b_ref, o_ref, xp_ref, *,
                 KH, KW, sh, sw, H, W, ph, pw, TH, W_out):
    """One (image n, output row-band hb) grid step.

    x_ref : (1, H, W, C_in)         unpadded NHWC image (VMEM, auto-pipelined)
    w_ref : (KH*KW*C_in, C_out_p)   flattened weight
    b_ref : (1, C_out_p)            bias (f32)
    o_ref : (1, TH*W_out, C_out_p)  output row-band
    xp_ref: (H_pad, W_pad, C_in)    padded-image VMEM scratch, persists across
                                    the band axis (filled once per image)
    """
    hb = pl.program_id(1)

    # Zero-pad the image into the persistent scratch once per image (hb == 0).
    # The halo stays zero across all bands of this image; the interior is a
    # cheap VMEM->VMEM copy (and the compute-dtype cast happens here, so the
    # wrapper never rewrites the activations in HBM).
    @pl.when(hb == 0)
    def _fill_padded_image():
        if ph or pw:
            xp_ref[...] = jnp.zeros_like(xp_ref)
        xp_ref[pl.ds(ph, H), pl.ds(pw, W), :] = x_ref[0].astype(xp_ref.dtype)

    row0 = hb * (TH * sh)  # first padded input row used by this band

    # Build the (TH*W_out, KH*KW*C_in) patch matrix in VMEM and issue ONE dot.
    wins = []
    for kh in range(KH):
        h_sl = pl.ds(row0 + kh, TH) if sh == 1 else pl.ds(row0 + kh, TH, sh)
        for kw in range(KW):
            w_sl = pl.ds(kw, W_out) if sw == 1 else pl.ds(kw, W_out, sw)
            win = xp_ref[h_sl, w_sl, :]                      # (TH, W_out, C_in)
            wins.append(win.reshape(TH * W_out, win.shape[-1]))
    patch = jnp.concatenate(wins, axis=-1)                   # (TH*W_out, KH*KW*C_in)

    acc = jnp.dot(patch, w_ref[...], preferred_element_type=jnp.float32)
    o_ref[0] = (acc + b_ref[...]).astype(o_ref.dtype)


def conv2d_pallas(x, weight, bias, stride, padding, mask=None,
                  compute_dtype=None, x_format="NCHW", out_format="NCHW",
                  band_rows=None):
    """Equivalent of Conv.forward(x, mask): F.conv2d(x, weight*mask, bias, ...)."""
    sh, sw = (stride, stride) if isinstance(stride, int) else tuple(stride)
    ph, pw = (padding, padding) if isinstance(padding, int) else tuple(padding)

    # Optional weight mask (same semantics as the PyTorch module).
    if mask is not None:
        if mask.ndim == 2:
            mask = mask[:, :, None, None]
        weight = weight * mask

    C_out, C_in_w, KH, KW = weight.shape

    if x_format == "NCHW":
        x_nhwc = jnp.transpose(x, (0, 2, 3, 1))
    else:  # already NHWC -> skip the layout pass over the activations
        x_nhwc = x
    N, H, W, C_in = x_nhwc.shape
    assert C_in == C_in_w, (C_in, C_in_w)

    H_out = (H + 2 * ph - KH) // sh + 1
    W_out = (W + 2 * pw - KW) // sw + 1
    H_pad, W_pad = H + 2 * ph, W + 2 * pw

    out_dtype = x.dtype
    if compute_dtype is None:
        compute_dtype = x.dtype  # keep f32 on v5e; bf16 only pays on v6e/v7x

    # --- weight / bias prep (tiny tensors; done once in the wrapper) ---------
    K_flat = KH * KW * C_in
    # Pad C_out to a multiple of 128 (lane-dense stores) only when the padding
    # overhead is small; small convs write the true width (masked stores cost
    # far less than 16x HBM write amplification + a post-kernel slice copy).
    C_out_r = _round_up(C_out, 128)
    C_out_p = C_out_r if (C_out_r - C_out) * 4 <= C_out else C_out

    # (C_out, C_in, KH, KW) -> (KH, KW, C_in, C_out) -> (KH*KW*C_in, C_out)
    w2 = jnp.transpose(weight, (2, 3, 1, 0)).reshape(K_flat, C_out)
    b2 = bias.astype(jnp.float32)
    if C_out_p != C_out:
        w2 = jnp.pad(w2, ((0, 0), (0, C_out_p - C_out)))
        b2 = jnp.pad(b2, (0, C_out_p - C_out))
    w2 = w2.astype(compute_dtype)
    b2 = b2.reshape(1, C_out_p)

    # --- output row-band tiling ----------------------------------------------
    if band_rows is None:
        band_rows = _pick_band_rows(H_out, W_out, C_out_p, K_flat,
                                    jnp.dtype(compute_dtype).itemsize)
    TH = band_rows
    if H_out % TH != 0 or (TH != H_out and (TH * W_out) % 8 != 0):
        raise ValueError(f"band_rows={TH} must divide H_out={H_out} and keep "
                         f"TH*W_out a multiple of 8")
    n_bands = H_out // TH

    kernel = functools.partial(
        _conv_kernel, KH=KH, KW=KW, sh=sh, sw=sw,
        H=H, W=W, ph=ph, pw=pw, TH=TH, W_out=W_out)

    out = pl.pallas_call(
        kernel,
        out_shape=jax.ShapeDtypeStruct((N, H_out * W_out, C_out_p), out_dtype),
        grid_spec=pltpu.PrefetchScalarGridSpec(
            num_scalar_prefetch=0,
            grid=(N, n_bands),
            in_specs=[
                # Unpadded image; constant over the band axis -> not re-DMA'd.
                pl.BlockSpec((1, H, W, C_in), lambda n, hb: (n, 0, 0, 0)),
                pl.BlockSpec((K_flat, C_out_p), lambda n, hb: (0, 0)),
                pl.BlockSpec((1, C_out_p), lambda n, hb: (0, 0)),
            ],
            out_specs=pl.BlockSpec((1, TH * W_out, C_out_p),
                                   lambda n, hb: (n, hb, 0)),
            scratch_shapes=[pltpu.VMEM((H_pad, W_pad, C_in), compute_dtype)],
        ),
        # Batch axis independent -> megacore split; band axis sequential per
        # image (the padded-image scratch is filled at hb == 0 and reused).
        compiler_params=pltpu.CompilerParams(
            dimension_semantics=("parallel", "arbitrary"),
            vmem_limit_bytes=64 * 1024 * 1024),
    )(x_nhwc, w2, b2)

    if C_out_p != C_out:
        out = out[:, :, :C_out]
    out = out.reshape(N, H_out, W_out, C_out)
    if out_format == "NCHW":
        out = jnp.transpose(out, (0, 3, 1, 2))
    return out


if __name__ == "__main__":
    # Module config: Conv(in_channels=4, out_channels=8, kernel=(3,3), stride=1, padding=1)
    in_channels, out_channels = 4, 8
    kernel_size = (3, 3)
    stride, padding = 1, 1

    key = jax.random.PRNGKey(0)
    k_w, k_x, k_m = jax.random.split(key, 3)

    # nn.init.uniform_(weight, -0.2, 0.2); nn.init.constant_(bias, 0)
    weight = jax.random.uniform(
        k_w, (out_channels, in_channels, *kernel_size),
        minval=-0.2, maxval=0.2, dtype=jnp.float32)
    bias = jnp.zeros((out_channels,), dtype=jnp.float32)
    x = jax.random.normal(k_x, (2, in_channels, 16, 16), dtype=jnp.float32)

    # Reference: XLA conv with the same NCHW / OIHW semantics as F.conv2d.
    ref = jax.lax.conv_general_dilated(
        x, weight, window_strides=(stride, stride),
        padding=((padding, padding), (padding, padding)),
        dimension_numbers=("NCHW", "OIHW", "NCHW"),
    ) + bias.reshape(1, -1, 1, 1)

    # 1) f32 path (single band at this size)
    out = jax.block_until_ready(conv2d_pallas(x, weight, bias, stride, padding))
    assert out.shape == ref.shape, (out.shape, ref.shape)
    assert jnp.allclose(out, ref, atol=1e-4, rtol=1e-4), "f32 mismatch vs XLA conv"

    # 2) forced multi-band path (exercises the H_out row-band grid axis)
    out_band = jax.block_until_ready(
        conv2d_pallas(x, weight, bias, stride, padding, band_rows=8))
    assert jnp.allclose(out_band, ref, atol=1e-4, rtol=1e-4), "banded mismatch vs XLA conv"

    # 3) bf16-operand / f32-accumulate path (v6e/v7x only; keep f32 on v5e)
    out_bf16 = jax.block_until_ready(
        conv2d_pallas(x, weight, bias, stride, padding,
                      compute_dtype=jnp.bfloat16))
    assert jnp.allclose(out_bf16, ref, atol=3e-2, rtol=3e-2), "bf16 mismatch vs XLA conv"

    # 4) masked forward (2D neuron mask broadcast like the PyTorch module)
    mask = (jax.random.uniform(k_m, (out_channels, in_channels)) > 0.5).astype(jnp.float32)
    ref_m = jax.lax.conv_general_dilated(
        x, weight * mask[:, :, None, None], window_strides=(stride, stride),
        padding=((padding, padding), (padding, padding)),
        dimension_numbers=("NCHW", "OIHW", "NCHW"),
    ) + bias.reshape(1, -1, 1, 1)
    out_m = jax.block_until_ready(
        conv2d_pallas(x, weight, bias, stride, padding, mask=mask))
    assert jnp.allclose(out_m, ref_m, atol=1e-4, rtol=1e-4), "masked mismatch vs XLA conv"

    print("KERNEL_OK")
</pallas_src>

<mosaic_0001>
module attributes {stable_mosaic.version = 11 : i64} {
  func.func @_conv_kernel(%arg0: i32, %arg1: i32, %arg2: memref<1x16x16x4xf32, #tpu.memory_space<vmem>>, %arg3: memref<36x8xf32, #tpu.memory_space<vmem>>, %arg4: memref<1x8xf32, #tpu.memory_space<vmem>>, %arg5: memref<1x256x8xf32, #tpu.memory_space<vmem>>, %arg6: memref<18x18x4xf32, #tpu.memory_space<vmem>>) attributes {dimension_semantics = [#tpu.dimension_semantics<parallel>, #tpu.dimension_semantics<arbitrary>], iteration_bounds = array<i64: 2, 1>, scalar_prefetch = 0 : i64, scratch_operands = 1 : i64, tpu.core_type = #tpu.core_type<tc>, window_params = [{transform_indices = @transform_0, window_bounds = array<i64: 1, 16, 16, 4>}, {pipeline_mode = #tpu.pipeline_mode<synchronous>, transform_indices = @transform_1, window_bounds = array<i64: 36, 8>}, {pipeline_mode = #tpu.pipeline_mode<synchronous>, transform_indices = @transform_2, window_bounds = array<i64: 1, 8>}, {transform_indices = @transform_3, window_bounds = array<i64: 1, 256, 8>}]} {
    %c0_i32 = arith.constant 0 : i32
    %0 = arith.cmpi eq, %arg1, %c0_i32 : i32
    %1 = arith.extui %0 : i1 to i32
    %c0_i32_0 = arith.constant 0 : i32
    %2 = arith.cmpi ne, %1, %c0_i32_0 : i32
    scf.if %2 {
      %cst_24 = arith.constant 0.000000e+00 : f32
      %43 = vector.broadcast %cst_24 : f32 to vector<18x18x4xf32>
      %c0_25 = arith.constant 0 : index
      %c0_26 = arith.constant 0 : index
      %c0_27 = arith.constant 0 : index
      %44 = vector.load %arg6[%c0_25, %c0_26, %c0_27] : memref<18x18x4xf32, #tpu.memory_space<vmem>>, vector<18x18x4xf32>
      tpu.vector_store %arg6[%c0_25, %c0_26, %c0_27], %43 {strides = array<i32>} : memref<18x18x4xf32, #tpu.memory_space<vmem>>, vector<18x18x4xf32>,
      %c0_28 = arith.constant 0 : index
      %c0_29 = arith.constant 0 : index
      %c0_30 = arith.constant 0 : index
      %c0_31 = arith.constant 0 : index
      %45 = vector.load %arg2[%c0_28, %c0_29, %c0_30, %c0_31] : memref<1x16x16x4xf32, #tpu.memory_space<vmem>>, vector<1x16x16x4xf32>
      %46 = vector.shape_cast %45 : vector<1x16x16x4xf32> to vector<16x16x4xf32>
      %c1_32 = arith.constant 1 : index
      %c1_33 = arith.constant 1 : index
      %c0_34 = arith.constant 0 : index
      %47 = vector.load %arg6[%c1_32, %c1_33, %c0_34] : memref<18x18x4xf32, #tpu.memory_space<vmem>>, vector<16x16x4xf32>
      tpu.vector_store %arg6[%c1_32, %c1_33, %c0_34], %46 {strides = array<i32>} : memref<18x18x4xf32, #tpu.memory_space<vmem>>, vector<16x16x4xf32>,
    } else {
    }
    %c16_i32 = arith.constant 16 : i32
    %3 = arith.muli %arg1, %c16_i32 : i32
    %c0_i32_1 = arith.constant 0 : i32
    %4 = arith.addi %3, %c0_i32_1 : i32
    %5 = arith.index_cast %4 : i32 to index
    %c0 = arith.constant 0 : index
    %c0_2 = arith.constant 0 : index
    %6 = vector.load %arg6[%5, %c0, %c0_2] : memref<18x18x4xf32, #tpu.memory_space<vmem>>, vector<16x16x4xf32>
    %7 = vector.shape_cast %6 : vector<16x16x4xf32> to vector<256x4xf32>
    %8 = arith.index_cast %4 : i32 to index
    %c1 = arith.constant 1 : index
    %c0_3 = arith.constant 0 : index
    %9 = vector.load %arg6[%8, %c1, %c0_3] : memref<18x18x4xf32, #tpu.memory_space<vmem>>, vector<16x16x4xf32>
    %10 = vector.shape_cast %9 : vector<16x16x4xf32> to vector<256x4xf32>
    %11 = arith.index_cast %4 : i32 to index
    %c2 = arith.constant 2 : index
    %c0_4 = arith.constant 0 : index
    %12 = vector.load %arg6[%11, %c2, %c0_4] : memref<18x18x4xf32, #tpu.memory_space<vmem>>, vector<16x16x4xf32>
    %13 = vector.shape_cast %12 : vector<16x16x4xf32> to vector<256x4xf32>
    %c1_i32 = arith.constant 1 : i32
    %14 = arith.addi %3, %c1_i32 : i32
    %15 = arith.index_cast %14 : i32 to index
    %c0_5 = arith.constant 0 : index
    %c0_6 = arith.constant 0 : index
    %16 = vector.load %arg6[%15, %c0_5, %c0_6] : memref<18x18x4xf32, #tpu.memory_space<vmem>>, vector<16x16x4xf32>
    %17 = vector.shape_cast %16 : vector<16x16x4xf32> to vector<256x4xf32>
    %18 = arith.index_cast %14 : i32 to index
    %c1_7 = arith.constant 1 : index
    %c0_8 = arith.constant 0 : index
    %19 = vector.load %arg6[%18, %c1_7, %c0_8] : memref<18x18x4xf32, #tpu.memory_space<vmem>>, vector<16x16x4xf32>
    %20 = vector.shape_cast %19 : vector<16x16x4xf32> to vector<256x4xf32>
    %21 = arith.index_cast %14 : i32 to index
    %c2_9 = arith.constant 2 : index
    %c0_10 = arith.constant 0 : index
    %22 = vector.load %arg6[%21, %c2_9, %c0_10] : memref<18x18x4xf32, #tpu.memory_space<vmem>>, vector<16x16x4xf32>
    %23 = vector.shape_cast %22 : vector<16x16x4xf32> to vector<256x4xf32>
    %c2_i32 = arith.constant 2 : i32
    %24 = arith.addi %3, %c2_i32 : i32
    %25 = arith.index_cast %24 : i32 to index
    %c0_11 = arith.constant 0 : index
    %c0_12 = arith.constant 0 : index
    %26 = vector.load %arg6[%25, %c0_11, %c0_12] : memref<18x18x4xf32, #tpu.memory_space<vmem>>, vector<16x16x4xf32>
    %27 = vector.shape_cast %26 : vector<16x16x4xf32> to vector<256x4xf32>
    %28 = arith.index_cast %24 : i32 to index
    %c1_13 = arith.constant 1 : index
    %c0_14 = arith.constant 0 : index
    %29 = vector.load %arg6[%28, %c1_13, %c0_14] : memref<18x18x4xf32, #tpu.memory_space<vmem>>, vector<16x16x4xf32>
    %30 = vector.shape_cast %29 : vector<16x16x4xf32> to vector<256x4xf32>
    %31 = arith.index_cast %24 : i32 to index
    %c2_15 = arith.constant 2 : index
    %c0_16 = arith.constant 0 : index
    %32 = vector.load %arg6[%31, %c2_15, %c0_16] : memref<18x18x4xf32, #tpu.memory_space<vmem>>, vector<16x16x4xf32>
    %33 = vector.shape_cast %32 : vector<16x16x4xf32> to vector<256x4xf32>
    %34 = tpu.concatenate %7, %10, %13, %17, %20, %23, %27, %30, %33 in 1 : vector<256x4xf32>, vector<256x4xf32>, vector<256x4xf32>, vector<256x4xf32>, vector<256x4xf32>, vector<256x4xf32>, vector<256x4xf32>, vector<256x4xf32>, vector<256x4xf32> -> vector<256x36xf32>
    %c0_17 = arith.constant 0 : index
    %c0_18 = arith.constant 0 : index
    %35 = vector.load %arg3[%c0_17, %c0_18] : memref<36x8xf32, #tpu.memory_space<vmem>>, vector<36x8xf32>
    %cst = arith.constant dense<0.000000e+00> : vector<256x8xf32>
    %36 = tpu.matmul %34, %35, %cst {dimension_numbers = #tpu.dot_dimension_numbers<[1], [0], [0], [1], [0, 0, 1, 1], [], []>} : vector<256x36xf32>, vector<36x8xf32>, vector<256x8xf32> -> vector<256x8xf32>
    %c0_19 = arith.constant 0 : index
    %c0_20 = arith.constant 0 : index
    %37 = vector.load %arg4[%c0_19, %c0_20] : memref<1x8xf32, #tpu.memory_space<vmem>>, vector<1x8xf32>
    %38 = vector.broadcast %37 : vector<1x8xf32> to vector<256x8xf32>
    %39 = arith.addf %36, %38 : vector<256x8xf32>
    %c0_21 = arith.constant 0 : index
    %c0_22 = arith.constant 0 : index
    %c0_23 = arith.constant 0 : index
    %40 = vector.load %arg5[%c0_21, %c0_22, %c0_23] : memref<1x256x8xf32, #tpu.memory_space<vmem>>, vector<1x256x8xf32>
    %41 = vector.shape_cast %40 : vector<1x256x8xf32> to vector<256x8xf32>
    %42 = vector.shape_cast %39 : vector<256x8xf32> to vector<1x256x8xf32>
    tpu.vector_store %arg5[%c0_21, %c0_22, %c0_23], %42 {strides = array<i32>} : memref<1x256x8xf32, #tpu.memory_space<vmem>>, vector<1x256x8xf32>,
    return
  }
  func.func @transform_0(%arg0: i32, %arg1: i32) -> (i32, i32, i32, i32) {
    %c0_i32 = arith.constant 0 : i32
    %c0_i32_0 = arith.constant 0 : i32
    %c0_i32_1 = arith.constant 0 : i32
    %c0_i32_2 = arith.constant 0 : i32
    return %arg0, %c0_i32, %c0_i32_0, %c0_i32_1 : i32, i32, i32, i32
  }
  func.func @transform_1(%arg0: i32, %arg1: i32) -> (i32, i32) {
    %c0_i32 = arith.constant 0 : i32
    %c0_i32_0 = arith.constant 0 : i32
    %c0_i32_1 = arith.constant 0 : i32
    return %c0_i32, %c0_i32_0 : i32, i32
  }
  func.func @transform_2(%arg0: i32, %arg1: i32) -> (i32, i32) {
    %c0_i32 = arith.constant 0 : i32
    %c0_i32_0 = arith.constant 0 : i32
    %c0_i32_1 = arith.constant 0 : i32
    return %c0_i32, %c0_i32_0 : i32, i32
  }
  func.func @transform_3(%arg0: i32, %arg1: i32) -> (i32, i32, i32) {
    %c0_i32 = arith.constant 0 : i32
    %c0_i32_0 = arith.constant 0 : i32
    return %arg0, %arg1, %c0_i32 : i32, i32, i32
  }
}

</mosaic_0001>

<llo_original>
// kernel: tpu_custom_call.1
$region0: #{tpu_custom_call.1}
  #allocation0 [shape = 'u32[]', space=smem, size = 0x4, offset = 0x4, fixed_abs, tag = 'smem constant byte address 0x4 - core index']
  #allocation1 [shape = 'u32[144,128]{1,0:T(1,128)}', space=vmem, size = 0x12000, scoped, tag = 'internal scratch']
  #allocation2 [shape = 'f32[18,18,4]{2,1,0:T(8,128)}', space=vmem, size = 0x36000, scoped, tag = 'scratch operand']
  %s0 = inlined_call_operand.hbm [shape: f32[2,16,16,4], index: 0, kind: input, shape index: {}]
  %s1 = inlined_call_operand.hbm [shape: f32[36,8], index: 1, kind: input, shape index: {}]
  %s2 = inlined_call_operand.hbm [shape: f32[1,8], index: 2, kind: input, shape index: {}]
  %s3 = inlined_call_operand.hbm [shape: f32[2,256,8], index: 3, kind: output, shape index: {}]
  %s4 = sld [smem:[#allocation0]]
  $region61: #{tpu_custom_call.1} parent=0
    _
  %s6 = ssub.s32 1, %s4
  %s7 = scalar_select 0, %s6, %s4
  $region1: #{tpu_custom_call.1} parent=0
    #allocation3 [shape = 'u8[262144]{0}', space=vmem, size = 0x40000, scoped, tag = 'input window, operand 0']
    #allocation4 [shape = 's32[2]{0}', space=sflag, size = 0x8, scoped, tag = 'scoped memory for tpu_custom_call.1']
    #allocation5 [shape = 's32[2]{0}', space=sflag, size = 0x8, scoped, tag = 'scoped memory for tpu_custom_call.1']
    #allocation6 [shape = 'u8[20480]{0}', space=vmem, size = 0x5000, scoped, tag = 'input window, operand 1, single buffered']
    #allocation7 [shape = 's32[1]{0}', space=sflag, size = 0x4, scoped, tag = 'scoped memory for tpu_custom_call.1']
    #allocation8 [shape = 'u8[512]{0}', space=vmem, size = 0x400, scoped, tag = 'input window, operand 2, single buffered']
    #allocation9 [shape = 'u8[262144]{0}', space=vmem, size = 0x40000, scoped, tag = 'output window, operand 0']
    %8 = vsyncpa [#allocation4], 0
    %s9 = scalar_lea.sflag [#allocation4], 1
    %10 = vsyncpa %s9, 0
    %11 = vsyncpa [#allocation7], 0
    %12 = vsyncpa [#allocation5], 0
    %s13 = scalar_lea.sflag [#allocation5], 1
    %14 = vsyncpa %s13, 0
    loop: start=0, step=1, limit=4
    $region2: #{tpu_custom_call.1} parent=1 // loop_pre_header
      _
    $region3: #{tpu_custom_call.1} parent=1 // loop_header
      %s16 = sphi 0, %s20
      %p17 = scmp.ge.s32.totalorder %s16, 4
      %s23 = sphi 0, %s35
      %s24 = sphi 0, %s31
      %s25 = sphi 0, %s23
      %s26 = sphi 0, %s24
      %s27 = sphi 0, %s25
      %s28 = sphi 0, %s26
      %s38 = sphi 0, %s40
      %s41 = sphi 0, %s38
      %s42 = sphi 0, %s41
      %s58 = sphi 0, %s42
      %s62 = sphi 0, %s62
      %s64 = sphi 0, %s62
      %s65 = sphi 0, %s64
      %s79 = sphi 0, %s65
      %s83 = sphi 0, %s83
      %s85 = sphi 0, %s83
      %s86 = sphi 0, %s85
      %s100 = sphi 0, %s86
      %s108 = sphi 0, %s110
      %s111 = sphi 0, %s108
      %s112 = sphi 0, %s111
      %s128 = sphi 0, %s112
    $region4: #{tpu_custom_call.1} parent=1 // loop_header_branch
      %19 = sbr.rel (%p17) target = $region8
    $region5: #{tpu_custom_call.1} parent=1 // loop_body
      %s21 = ssub.s32 %s16, 1
      %s22 = ssub.s32 %s16, 2
      %s29 = sadd.s32 1, %s24
      %p30 = scmp.ge.s32.totalorder %s29, 1
      %s31 = scalar_select %p30, 0, %s29
      %s32 = sadd.s32 1, %s23
      %s33 = scalar_select %p30, %s32, %s23
      %p34 = scmp.ge.s32.totalorder %s33, 2
      %s35 = scalar_select %p34, 0, %s33
      %s36 = ssub.s32 %s23, %s35
      %p37 = scmp.eq.s32.totalorder %s36, 0
      %s39 = sadd.s32 %s38, 1
      %s40 = scalar_select %p37, %s38, %s39
      %p43 = pneg %p37
      %p44 = scmp.eq.s32.totalorder %s16, 1
      %p45 = por %p43, %p44
      %p46 = scmp.ne.s32.totalorder %s38, %s41
      %p47 = scmp.eq.s32.totalorder %s16, 0
      %p48 = por %p46, %p47
      %p49 = scmp.ne.s32.totalorder %s38, %s41
      %p50 = scmp.eq.s32.totalorder %s21, 1
      %p51 = por %p49, %p50
      %p52 = scmp.ne.s32.totalorder %s41, %s42
      %p53 = scmp.eq.s32.totalorder %s21, 0
      %p54 = por %p52, %p53
      %p55 = scmp.ne.s32.totalorder %s41, %s42
      %p56 = scmp.eq.s32.totalorder %s22, 1
      %p57 = por %p55, %p56
      %p59 = scmp.ne.s32.totalorder %s42, %s58
      %p60 = scmp.eq.s32.totalorder %s22, 0
      %p61 = por %p59, %p60
      %s63 = sadd.s32 %s62, 1
      %p66 = scmp.eq.s32.totalorder %s16, 1
      %p67 = scmp.ne.s32.totalorder %s62, %s64
      %p68 = scmp.eq.s32.totalorder %s16, 0
      %p69 = por %p67, %p68
      %p70 = scmp.ne.s32.totalorder %s62, %s64
      %p71 = scmp.eq.s32.totalorder %s21, 1
      %p72 = por %p70, %p71
      %p73 = scmp.ne.s32.totalorder %s64, %s65
      %p74 = scmp.eq.s32.totalorder %s21, 0
      %p75 = por %p73, %p74
      %p76 = scmp.ne.s32.totalorder %s64, %s65
      %p77 = scmp.eq.s32.totalorder %s22, 1
      %p78 = por %p76, %p77
      %p80 = scmp.ne.s32.totalorder %s65, %s79
      %p81 = scmp.eq.s32.totalorder %s22, 0
      %p82 = por %p80, %p81
      %s84 = sadd.s32 %s83, 1
      %p87 = scmp.eq.s32.totalorder %s16, 1
      %p88 = scmp.ne.s32.totalorder %s83, %s85
      %p89 = scmp.eq.s32.totalorder %s16, 0
      %p90 = por %p88, %p89
      %p91 = scmp.ne.s32.totalorder %s83, %s85
      %p92 = scmp.eq.s32.totalorder %s21, 1
      %p93 = por %p91, %p92
      %p94 = scmp.ne.s32.totalorder %s85, %s86
      %p95 = scmp.eq.s32.totalorder %s21, 0
      %p96 = por %p94, %p95
      %p97 = scmp.ne.s32.totalorder %s85, %s86
      %p98 = scmp.eq.s32.totalorder %s22, 1
      %p99 = por %p97, %p98
      %p101 = scmp.ne.s32.totalorder %s86, %s100
      %p102 = scmp.eq.s32.totalorder %s22, 0
      %p103 = por %p101, %p102
      %s104 = ssub.s32 %s23, %s35
      %s105 = ssub.s32 %s24, %s31
      %s106 = sor.u32 %s104, %s105
      %p107 = scmp.eq.s32.totalorder %s106, 0
      %s109 = sadd.s32 %s108, 1
      %s110 = scalar_select %p107, %s108, %s109
      %p113 = pneg %p107
      %p114 = scmp.eq.s32.totalorder %s16, 1
      %p115 = por %p113, %p114
      %p116 = scmp.ne.s32.totalorder %s108, %s111
      %p117 = scmp.eq.s32.totalorder %s16, 0
      %p118 = por %p116, %p117
      %p119 = scmp.ne.s32.totalorder %s108, %s111
      %p120 = scmp.eq.s32.totalorder %s21, 1
      %p121 = por %p119, %p120
      %p122 = scmp.ne.s32.totalorder %s111, %s112
      %p123 = scmp.eq.s32.totalorder %s21, 0
      %p124 = por %p122, %p123
      %p125 = scmp.ne.s32.totalorder %s111, %s112
      %p126 = scmp.eq.s32.totalorder %s22, 1
      %p127 = por %p125, %p126
      %p129 = scmp.ne.s32.totalorder %s112, %s128
      %p130 = scmp.eq.s32.totalorder %s22, 0
      %p131 = por %p129, %p130
      %p132 = scmp.le.s32.totalorder 1, %s16
      %p133 = scmp.lt.s32.totalorder %s16, 3
      %p134 = pnand %p132, %p133
      %p135 = pneg %p134
      // Predicated region
      $region9: #{tpu_custom_call.1} parent=5 // pred_check
        _
      $region10: #{tpu_custom_call.1} parent=5 // pred_check_branch
        %137 = sbr.rel (%p134) target = $region12
      $region11: #{tpu_custom_call.1} parent=5 // pred_region
        %s138 = ssub.s32 %s16, 1
        // Predicated region
        $region13: #{tpu_custom_call.1} parent=11 // pred_check
          %p139 = pneg %p75
        $region14: #{tpu_custom_call.1} parent=11 // pred_check_branch
          %141 = sbr.rel (%p139) target = $region16
        $region15: #{tpu_custom_call.1} parent=11 // pred_region
          %s143 = ssub.s32 640, 640
          %144 = vsyncadd [#allocation7], %s143
          %s145 = sshll.u32 [#allocation6], 4
          %s146 = int_to_ptr.vmem [resolvable:$true] %s145
          %151 = dma.hbm_to_vmem [thread:$0]  %s1, 640, %s146, [#allocation7], 128, 128, 8
        $region16: #{tpu_custom_call.1} parent=11 // pred_fallthru
          _
        // Predicated region
        $region17: #{tpu_custom_call.1} parent=11 // pred_check
          %p152 = pneg %p96
        $region18: #{tpu_custom_call.1} parent=11 // pred_check_branch
          %154 = sbr.rel (%p152) target = $region20
        $region19: #{tpu_custom_call.1} parent=11 // pred_region
          %s156 = ssub.s32 16, 16
          %157 = vsyncadd [#allocation7], %s156
          %s159 = sshll.u32 [#allocation8], 4
          %s160 = int_to_ptr.vmem [resolvable:$true] %s159
          %162 = dma.hbm_to_vmem [thread:$0]  %s2, 16, %s160, [#allocation7]
        $region20: #{tpu_custom_call.1} parent=11 // pred_fallthru
          _
      $region12: #{tpu_custom_call.1} parent=5 // pred_fallthru
        _
      %p163 = scmp.lt.s32.totalorder %s16, 2
      // Predicated region
      $region21: #{tpu_custom_call.1} parent=5 // pred_check
        %p164 = pneg %p163
      $region22: #{tpu_custom_call.1} parent=5 // pred_check_branch
        %166 = sbr.rel (%p164) target = $region24
      $region23: #{tpu_custom_call.1} parent=5 // pred_region
        // Predicated region
        $region25: #{tpu_custom_call.1} parent=23 // pred_check
          %p167 = pneg %p48
        $region26: #{tpu_custom_call.1} parent=23 // pred_check_branch
          %169 = sbr.rel (%p167) target = $region28
        $region27: #{tpu_custom_call.1} parent=23 // pred_region
          %s170 = sand.u32 %s38, 1
          %s171 = scalar_lea.sflag [#allocation4], %s170
          %s172 = sand.u32 %s38, 1
          %s173 = smul.addr %s172, 256
          %s174 = scalar_lea.vmem [#allocation3], %s173
          %s176 = ssub.s32 4096, 4096
          %177 = vsyncadd %s171, %s176
          %s178 = smul.addr %s23, 32
          %s179 = smul.addr %s178, 128
          %s180 = scalar_lea.hbm %s0, %s179
          %s181 = sshll.u32 %s174, 4
          %s182 = int_to_ptr.vmem [resolvable:$true] %s181
          %187 = dma.hbm_to_vmem [thread:$0]  %s180, 4096, %s182, %s171, 128, 128, 8
        $region28: #{tpu_custom_call.1} parent=23 // pred_fallthru
          _
      $region24: #{tpu_custom_call.1} parent=5 // pred_fallthru
        _
      %p188 = scmp.le.s32.totalorder 1, %s16
      %p189 = scmp.lt.s32.totalorder %s16, 3
      %p190 = pnand %p188, %p189
      %p191 = pneg %p190
      // Predicated region
      $region29: #{tpu_custom_call.1} parent=5 // pred_check
        _
      $region30: #{tpu_custom_call.1} parent=5 // pred_check_branch
        %193 = sbr.rel (%p190) target = $region32
      $region31: #{tpu_custom_call.1} parent=5 // pred_region
        %s194 = ssub.s32 %s16, 1
        %s195 = sand.u32 %s41, 1
        %s196 = scalar_lea.sflag [#allocation4], %s195
        %s197 = sand.u32 %s41, 1
        %s198 = smul.addr %s197, 256
        %s199 = scalar_lea.vmem [#allocation3], %s198
        // Predicated region
        $region33: #{tpu_custom_call.1} parent=31 // pred_check
          %p200 = pneg %p54
        $region34: #{tpu_custom_call.1} parent=31 // pred_check_branch
          %202 = sbr.rel (%p200) target = $region36
        $region35: #{tpu_custom_call.1} parent=31 // pred_region
          %203 = dma.done %s196, 4096
        $region36: #{tpu_custom_call.1} parent=31 // pred_fallthru
          _
        // Predicated region
        $region37: #{tpu_custom_call.1} parent=31 // pred_check
          %p204 = pneg %p75
        $region38: #{tpu_custom_call.1} parent=31 // pred_check_branch
          %206 = sbr.rel (%p204) target = $region40
        $region39: #{tpu_custom_call.1} parent=31 // pred_region
          %207 = dma.done [#allocation7], 640
        $region40: #{tpu_custom_call.1} parent=31 // pred_fallthru
          _
        // Predicated region
        $region41: #{tpu_custom_call.1} parent=31 // pred_check
          %p208 = pneg %p96
        $region42: #{tpu_custom_call.1} parent=31 // pred_check_branch
          %210 = sbr.rel (%p208) target = $region44
        $region43: #{tpu_custom_call.1} parent=31 // pred_region
          %211 = dma.done [#allocation7], 16
        $region44: #{tpu_custom_call.1} parent=31 // pred_fallthru
          _
        %s212 = sand.u32 %s41, 1
        %s213 = scalar_lea.sflag [#allocation4], %s212
        %s214 = sand.u32 %s41, 1
        %s215 = smul.addr %s214, 256
        %s216 = scalar_lea.vmem [#allocation3], %s215
        %p217 = pneg %p54
        %p218 = pneg %p51
        %p219 = pneg %p75
        %p220 = pneg %p72
        %p221 = pneg %p96
        %p222 = pneg %p93
        %p223 = pneg %p124
        %p224 = pneg %p121
        %s225 = sand.u32 %s111, 1
        %s226 = scalar_lea.sflag [#allocation5], %s225
        %s227 = sand.u32 %s111, 1
        %s228 = smul.addr %s227, 256
        %s229 = scalar_lea.vmem [#allocation9], %s228
        %s230 = smul.u32 32, %s26
        %p231 = scmp.eq.s32.totalorder %s26, 0
        // Predicated region
        $region45: #{tpu_custom_call.1} parent=31 // pred_check
          %p232 = pneg %p231
        $region46: #{tpu_custom_call.1} parent=31 // pred_check_branch
          %234 = sbr.rel (%p232) target = $region48
        $region47: #{tpu_custom_call.1} parent=31 // pred_region
          %vm235 = vcmask 31744
          %236 = vst.msk [vmem:[#allocation2] sm:$0xff] %vm235, 0.0
          %237 = vst.msk [vmem:[#allocation2 + $0x8] sm:$0xff] %vm235, 0.0
          %vm238 = vcmask 25600
          %239 = vst.msk [vmem:[#allocation2 + $0x10] sm:$0x3] %vm238, 0.0
          %240 = vst.msk [vmem:[#allocation2 + $0x18] sm:$0xff] %vm235, 0.0
          %241 = vst.msk [vmem:[#allocation2 + $0x20] sm:$0xff] %vm235, 0.0
          %242 = vst.msk [vmem:[#allocation2 + $0x28] sm:$0x3] %vm238, 0.0
          %243 = vst.msk [vmem:[#allocation2 + $0x30] sm:$0xff] %vm235, 0.0
          %244 = vst.msk [vmem:[#allocation2 + $0x38] sm:$0xff] %vm235, 0.0
          %245 = vst.msk [vmem:[#allocation2 + $0x40] sm:$0x3] %vm238, 0.0
          %246 = vst.msk [vmem:[#allocation2 + $0x48] sm:$0xff] %vm235, 0.0
          %247 = vst.msk [vmem:[#allocation2 + $0x50] sm:$0xff] %vm235, 0.0
          %248 = vst.msk [vmem:[#allocation2 + $0x58] sm:$0x3] %vm238, 0.0
          %249 = vst.msk [vmem:[#allocation2 + $0x60] sm:$0xff] %vm235, 0.0
          %250 = vst.msk [vmem:[#allocation2 + $0x68] sm:$0xff] %vm235, 0.0
          %251 = vst.msk [vmem:[#allocation2 + $0x70] sm:$0x3] %vm238, 0.0
          %252 = vst.msk [vmem:[#allocation2 + $0x78] sm:$0xff] %vm235, 0.0
          %253 = vst.msk [vmem:[#allocation2 + $0x80] sm:$0xff] %vm235, 0.0
          %254 = vst.msk [vmem:[#allocation2 + $0x88] sm:$0x3] %vm238, 0.0
          %255 = vst.msk [vmem:[#allocation2 + $0x90] sm:$0xff] %vm235, 0.0
          %256 = vst.msk [vmem:[#allocation2 + $0x98] sm:$0xff] %vm235, 0.0
          %257 = vst.msk [vmem:[#allocation2 + $0xa0] sm:$0x3] %vm238, 0.0
          %258 = vst.msk [vmem:[#allocation2 + $0xa8] sm:$0xff] %vm235, 0.0
          %259 = vst.msk [vmem:[#allocation2 + $0xb0] sm:$0xff] %vm235, 0.0
          %260 = vst.msk [vmem:[#allocation2 + $0xb8] sm:$0x3] %vm238, 0.0
          %261 = vst.msk [vmem:[#allocation2 + $0xc0] sm:$0xff] %vm235, 0.0
          %262 = vst.msk [vmem:[#allocation2 + $0xc8] sm:$0xff] %vm235, 0.0
          %263 = vst.msk [vmem:[#allocation2 + $0xd0] sm:$0x3] %vm238, 0.0
          %264 = vst.msk [vmem:[#allocation2 + $0xd8] sm:$0xff] %vm235, 0.0
          %265 = vst.msk [vmem:[#allocation2 + $0xe0] sm:$0xff] %vm235, 0.0
          %266 = vst.msk [vmem:[#allocation2 + $0xe8] sm:$0x3] %vm238, 0.0
          %267 = vst.msk [vmem:[#allocation2 + $0xf0] sm:$0xff] %vm235, 0.0
          %268 = vst.msk [vmem:[#allocation2 + $0xf8] sm:$0xff] %vm235, 0.0
          %269 = vst.msk [vmem:[#allocation2 + $0x100] sm:$0x3] %vm238, 0.0
          %270 = vst.msk [vmem:[#allocation2 + $0x108] sm:$0xff] %vm235, 0.0
          %271 = vst.msk [vmem:[#allocation2 + $0x110] sm:$0xff] %vm235, 0.0
          %272 = vst.msk [vmem:[#allocation2 + $0x118] sm:$0x3] %vm238, 0.0
          %273 = vst.msk [vmem:[#allocation2 + $0x120] sm:$0xff] %vm235, 0.0
          %274 = vst.msk [vmem:[#allocation2 + $0x128] sm:$0xff] %vm235, 0.0
          %275 = vst.msk [vmem:[#allocation2 + $0x130] sm:$0x3] %vm238, 0.0
          %276 = vst.msk [vmem:[#allocation2 + $0x138] sm:$0xff] %vm235, 0.0
          %277 = vst.msk [vmem:[#allocation2 + $0x140] sm:$0xff] %vm235, 0.0
          %278 = vst.msk [vmem:[#allocation2 + $0x148] sm:$0x3] %vm238, 0.0
          %279 = vst.msk [vmem:[#allocation2 + $0x150] sm:$0xff] %vm235, 0.0
          %280 = vst.msk [vmem:[#allocation2 + $0x158] sm:$0xff] %vm235, 0.0
          %281 = vst.msk [vmem:[#allocation2 + $0x160] sm:$0x3] %vm238, 0.0
          %282 = vst.msk [vmem:[#allocation2 + $0x168] sm:$0xff] %vm235, 0.0
          %283 = vst.msk [vmem:[#allocation2 + $0x170] sm:$0xff] %vm235, 0.0
          %284 = vst.msk [vmem:[#allocation2 + $0x178] sm:$0x3] %vm238, 0.0
          %285 = vst.msk [vmem:[#allocation2 + $0x180] sm:$0xff] %vm235, 0.0
          %286 = vst.msk [vmem:[#allocation2 + $0x188] sm:$0xff] %vm235, 0.0
          %287 = vst.msk [vmem:[#allocation2 + $0x190] sm:$0x3] %vm238, 0.0
          %288 = vst.msk [vmem:[#allocation2 + $0x198] sm:$0xff] %vm235, 0.0
          %289 = vst.msk [vmem:[#allocation2 + $0x1a0] sm:$0xff] %vm235, 0.0
          %290 = vst.msk [vmem:[#allocation2 + $0x1a8] sm:$0x3] %vm238, 0.0
          %v291 = vld [vmem:[%s199] sm:$0xff]
          %v292 = vld [vmem:[%s199 + $0x8] sm:$0xff]
          %v293 = vld [vmem:[%s199 + $0x10] sm:$0xff]
          %v294 = vld [vmem:[%s199 + $0x18] sm:$0xff]
          %v295 = vld [vmem:[%s199 + $0x20] sm:$0xff]
          %v296 = vld [vmem:[%s199 + $0x28] sm:$0xff]
          %v297 = vld [vmem:[%s199 + $0x30] sm:$0xff]
          %v298 = vld [vmem:[%s199 + $0x38] sm:$0xff]
          %v299 = vld [vmem:[%s199 + $0x40] sm:$0xff]
          %v300 = vld [vmem:[%s199 + $0x48] sm:$0xff]
          %v301 = vld [vmem:[%s199 + $0x50] sm:$0xff]
          %v302 = vld [vmem:[%s199 + $0x58] sm:$0xff]
          %v303 = vld [vmem:[%s199 + $0x60] sm:$0xff]
          %v304 = vld [vmem:[%s199 + $0x68] sm:$0xff]
          %v305 = vld [vmem:[%s199 + $0x70] sm:$0xff]
          %v306 = vld [vmem:[%s199 + $0x78] sm:$0xff]
          %v307 = vld [vmem:[%s199 + $0x80] sm:$0xff]
          %v308 = vld [vmem:[%s199 + $0x88] sm:$0xff]
          %v309 = vld [vmem:[%s199 + $0x90] sm:$0xff]
          %v310 = vld [vmem:[%s199 + $0x98] sm:$0xff]
          %v311 = vld [vmem:[%s199 + $0xa0] sm:$0xff]
          %v312 = vld [vmem:[%s199 + $0xa8] sm:$0xff]
          %v313 = vld [vmem:[%s199 + $0xb0] sm:$0xff]
          %v314 = vld [vmem:[%s199 + $0xb8] sm:$0xff]
          %v315 = vld [vmem:[%s199 + $0xc0] sm:$0xff]
          %v316 = vld [vmem:[%s199 + $0xc8] sm:$0xff]
          %v317 = vld [vmem:[%s199 + $0xd0] sm:$0xff]
          %v318 = vld [vmem:[%s199 + $0xd8] sm:$0xff]
          %v319 = vld [vmem:[%s199 + $0xe0] sm:$0xff]
          %v320 = vld [vmem:[%s199 + $0xe8] sm:$0xff]
          %v321 = vld [vmem:[%s199 + $0xf0] sm:$0xff]
          %v322 = vld [vmem:[%s199 + $0xf8] sm:$0xff]
          %s323 = scalar_lea.vmem [#allocation2], 24
          %324 = vst.msk [vmem:[%s323 + $0x1] sm:$0xff] %vm235, %v291
          %325 = vst.msk [vmem:[%s323 + $0x9] sm:$0xff] %vm235, %v292
          %326 = vst.msk [vmem:[%s323 + $0x19] sm:$0xff] %vm235, %v293
          %327 = vst.msk [vmem:[%s323 + $0x21] sm:$0xff] %vm235, %v294
          %328 = vst.msk [vmem:[%s323 + $0x31] sm:$0xff] %vm235, %v295
          %329 = vst.msk [vmem:[%s323 + $0x39] sm:$0xff] %vm235, %v296
          %330 = vst.msk [vmem:[%s323 + $0x49] sm:$0xff] %vm235, %v297
          %331 = vst.msk [vmem:[%s323 + $0x51] sm:$0xff] %vm235, %v298
          %332 = vst.msk [vmem:[%s323 + $0x61] sm:$0xff] %vm235, %v299
          %333 = vst.msk [vmem:[%s323 + $0x69] sm:$0xff] %vm235, %v300
          %334 = vst.msk [vmem:[%s323 + $0x79] sm:$0xff] %vm235, %v301
          %335 = vst.msk [vmem:[%s323 + $0x81] sm:$0xff] %vm235, %v302
          %336 = vst.msk [vmem:[%s323 + $0x91] sm:$0xff] %vm235, %v303
          %337 = vst.msk [vmem:[%s323 + $0x99] sm:$0xff] %vm235, %v304
          %338 = vst.msk [vmem:[%s323 + $0xa9] sm:$0xff] %vm235, %v305
          %339 = vst.msk [vmem:[%s323 + $0xb1] sm:$0xff] %vm235, %v306
          %340 = vst.msk [vmem:[%s323 + $0xc1] sm:$0xff] %vm235, %v307
          %341 = vst.msk [vmem:[%s323 + $0xc9] sm:$0xff] %vm235, %v308
          %342 = vst.msk [vmem:[%s323 + $0xd9] sm:$0xff] %vm235, %v309
          %343 = vst.msk [vmem:[%s323 + $0xe1] sm:$0xff] %vm235, %v310
          %344 = vst.msk [vmem:[%s323 + $0xf1] sm:$0xff] %vm235, %v311
          %345 = vst.msk [vmem:[%s323 + $0xf9] sm:$0xff] %vm235, %v312
          %346 = vst.msk [vmem:[%s323 + $0x109] sm:$0xff] %vm235, %v313
          %347 = vst.msk [vmem:[%s323 + $0x111] sm:$0xff] %vm235, %v314
          %348 = vst.msk [vmem:[%s323 + $0x121] sm:$0xff] %vm235, %v315
          %349 = vst.msk [vmem:[%s323 + $0x129] sm:$0xff] %vm235, %v316
          %350 = vst.msk [vmem:[%s323 + $0x139] sm:$0xff] %vm235, %v317
          %351 = vst.msk [vmem:[%s323 + $0x141] sm:$0xff] %vm235, %v318
          %352 = vst.msk [vmem:[%s323 + $0x151] sm:$0xff] %vm235, %v319
          %353 = vst.msk [vmem:[%s323 + $0x159] sm:$0xff] %vm235, %v320
          %354 = vst.msk [vmem:[%s323 + $0x169] sm:$0xff] %vm235, %v321
          %355 = vst.msk [vmem:[%s323 + $0x171] sm:$0xff] %vm235, %v322
        $region48: #{tpu_custom_call.1} parent=31 // pred_fallthru
          _
        %s356 = smul.u32 %s26, 16
        %s357 = smul.u32 %s356, 24
        %s358 = scalar_lea.vmem [#allocation2], %s357
        %v359 = vld [vmem:[%s358] sm:$0xff]
        %v360 = vld [vmem:[%s358 + $0x8] sm:$0xff]
        %v361 = vld [vmem:[%s358 + $0x18] sm:$0xff]
        %v362 = vld [vmem:[%s358 + $0x20] sm:$0xff]
        %v363 = vld [vmem:[%s358 + $0x30] sm:$0xff]
        %v364 = vld [vmem:[%s358 + $0x38] sm:$0xff]
        %v365 = vld [vmem:[%s358 + $0x48] sm:$0xff]
        %v366 = vld [vmem:[%s358 + $0x50] sm:$0xff]
        %v367 = vld [vmem:[%s358 + $0x60] sm:$0xff]
        %v368 = vld [vmem:[%s358 + $0x68] sm:$0xff]
        %v369 = vld [vmem:[%s358 + $0x78] sm:$0xff]
        %v370 = vld [vmem:[%s358 + $0x80] sm:$0xff]
        %v371 = vld [vmem:[%s358 + $0x90] sm:$0xff]
        %v372 = vld [vmem:[%s358 + $0x98] sm:$0xff]
        %v373 = vld [vmem:[%s358 + $0xa8] sm:$0xff]
        %v374 = vld [vmem:[%s358 + $0xb0] sm:$0xff]
        %v375 = vld [vmem:[%s358 + $0xc0] sm:$0xff]
        %v376 = vld [vmem:[%s358 + $0xc8] sm:$0xff]
        %v377 = vld [vmem:[%s358 + $0xd8] sm:$0xff]
        %v378 = vld [vmem:[%s358 + $0xe0] sm:$0xff]
        %v379 = vld [vmem:[%s358 + $0xf0] sm:$0xff]
        %v380 = vld [vmem:[%s358 + $0xf8] sm:$0xff]
        %v381 = vld [vmem:[%s358 + $0x108] sm:$0xff]
        %v382 = vld [vmem:[%s358 + $0x110] sm:$0xff]
        %v383 = vld [vmem:[%s358 + $0x120] sm:$0xff]
        %v384 = vld [vmem:[%s358 + $0x128] sm:$0xff]
        %v385 = vld [vmem:[%s358 + $0x138] sm:$0xff]
        %v386 = vld [vmem:[%s358 + $0x140] sm:$0xff]
        %v387 = vld [vmem:[%s358 + $0x150] sm:$0xff]
        %v388 = vld [vmem:[%s358 + $0x158] sm:$0xff]
        %v389 = vld [vmem:[%s358 + $0x168] sm:$0xff]
        %v390 = vld [vmem:[%s358 + $0x170] sm:$0xff]
        %v391 = vld [vmem:[%s358 + $0x1] sm:$0xff]
        %v392 = vld [vmem:[%s358 + $0x9] sm:$0xff]
        %v393 = vld [vmem:[%s358 + $0x19] sm:$0xff]
        %v394 = vld [vmem:[%s358 + $0x21] sm:$0xff]
        %v395 = vld [vmem:[%s358 + $0x31] sm:$0xff]
        %v396 = vld [vmem:[%s358 + $0x39] sm:$0xff]
        %v397 = vld [vmem:[%s358 + $0x49] sm:$0xff]
        %v398 = vld [vmem:[%s358 + $0x51] sm:$0xff]
        %v399 = vld [vmem:[%s358 + $0x61] sm:$0xff]
        %v400 = vld [vmem:[%s358 + $0x69] sm:$0xff]
        %v401 = vld [vmem:[%s358 + $0x79] sm:$0xff]
        %v402 = vld [vmem:[%s358 + $0x81] sm:$0xff]
        %v403 = vld [vmem:[%s358 + $0x91] sm:$0xff]
        %v404 = vld [vmem:[%s358 + $0x99] sm:$0xff]
        %v405 = vld [vmem:[%s358 + $0xa9] sm:$0xff]
        %v406 = vld [vmem:[%s358 + $0xb1] sm:$0xff]
        %v407 = vld [vmem:[%s358 + $0xc1] sm:$0xff]
        %v408 = vld [vmem:[%s358 + $0xc9] sm:$0xff]
        %v409 = vld [vmem:[%s358 + $0xd9] sm:$0xff]
        %v410 = vld [vmem:[%s358 + $0xe1] sm:$0xff]
        %v411 = vld [vmem:[%s358 + $0xf1] sm:$0xff]
        %v412 = vld [vmem:[%s358 + $0xf9] sm:$0xff]
        %v413 = vld [vmem:[%s358 + $0x109] sm:$0xff]
        %v414 = vld [vmem:[%s358 + $0x111] sm:$0xff]
        %v415 = vld [vmem:[%s358 + $0x121] sm:$0xff]
        %v416 = vld [vmem:[%s358 + $0x129] sm:$0xff]
        %v417 = vld [vmem:[%s358 + $0x139] sm:$0xff]
        %v418 = vld [vmem:[%s358 + $0x141] sm:$0xff]
        %v419 = vld [vmem:[%s358 + $0x151] sm:$0xff]
        %v420 = vld [vmem:[%s358 + $0x159] sm:$0xff]
        %v421 = vld [vmem:[%s358 + $0x169] sm:$0xff]
        %v422 = vld [vmem:[%s358 + $0x171] sm:$0xff]
        %v423 = vld [vmem:[%s358 + $0x2] sm:$0xff]
        %v424 = vld [vmem:[%s358 + $0xa] sm:$0xff]
        %v425 = vld [vmem:[%s358 + $0x1a] sm:$0xff]
        %v426 = vld [vmem:[%s358 + $0x22] sm:$0xff]
        %v427 = vld [vmem:[%s358 + $0x32] sm:$0xff]
        %v428 = vld [vmem:[%s358 + $0x3a] sm:$0xff]
        %v429 = vld [vmem:[%s358 + $0x4a] sm:$0xff]
        %v430 = vld [vmem:[%s358 + $0x52] sm:$0xff]
        %v431 = vld [vmem:[%s358 + $0x62] sm:$0xff]
        %v432 = vld [vmem:[%s358 + $0x6a] sm:$0xff]
        %v433 = vld [vmem:[%s358 + $0x7a] sm:$0xff]
        %v434 = vld [vmem:[%s358 + $0x82] sm:$0xff]
        %v435 = vld [vmem:[%s358 + $0x92] sm:$0xff]
        %v436 = vld [vmem:[%s358 + $0x9a] sm:$0xff]
        %v437 = vld [vmem:[%s358 + $0xaa] sm:$0xff]
        %v438 = vld [vmem:[%s358 + $0xb2] sm:$0xff]
        %v439 = vld [vmem:[%s358 + $0xc2] sm:$0xff]
        %v440 = vld [vmem:[%s358 + $0xca] sm:$0xff]
        %v441 = vld [vmem:[%s358 + $0xda] sm:$0xff]
        %v442 = vld [vmem:[%s358 + $0xe2] sm:$0xff]
        %v443 = vld [vmem:[%s358 + $0xf2] sm:$0xff]
        %v444 = vld [vmem:[%s358 + $0xfa] sm:$0xff]
        %v445 = vld [vmem:[%s358 + $0x10a] sm:$0xff]
        %v446 = vld [vmem:[%s358 + $0x112] sm:$0xff]
        %v447 = vld [vmem:[%s358 + $0x122] sm:$0xff]
        %v448 = vld [vmem:[%s358 + $0x12a] sm:$0xff]
        %v449 = vld [vmem:[%s358 + $0x13a] sm:$0xff]
        %v450 = vld [vmem:[%s358 + $0x142] sm:$0xff]
        %v451 = vld [vmem:[%s358 + $0x152] sm:$0xff]
        %v452 = vld [vmem:[%s358 + $0x15a] sm:$0xff]
        %v453 = vld [vmem:[%s358 + $0x16a] sm:$0xff]
        %v454 = vld [vmem:[%s358 + $0x172] sm:$0xff]
        %s455 = sadd.s32 %s356, 1
        %s456 = smul.u32 %s455, 24
        %s457 = scalar_lea.vmem [#allocation2], %s456
        %v458 = vld [vmem:[%s457] sm:$0xff]
        %v459 = vld [vmem:[%s457 + $0x8] sm:$0xff]
        %v460 = vld [vmem:[%s457 + $0x18] sm:$0xff]
        %v461 = vld [vmem:[%s457 + $0x20] sm:$0xff]
        %v462 = vld [vmem:[%s457 + $0x30] sm:$0xff]
        %v463 = vld [vmem:[%s457 + $0x38] sm:$0xff]
        %v464 = vld [vmem:[%s457 + $0x48] sm:$0xff]
        %v465 = vld [vmem:[%s457 + $0x50] sm:$0xff]
        %v466 = vld [vmem:[%s457 + $0x60] sm:$0xff]
        %v467 = vld [vmem:[%s457 + $0x68] sm:$0xff]
        %v468 = vld [vmem:[%s457 + $0x78] sm:$0xff]
        %v469 = vld [vmem:[%s457 + $0x80] sm:$0xff]
        %v470 = vld [vmem:[%s457 + $0x90] sm:$0xff]
        %v471 = vld [vmem:[%s457 + $0x98] sm:$0xff]
        %v472 = vld [vmem:[%s457 + $0xa8] sm:$0xff]
        %v473 = vld [vmem:[%s457 + $0xb0] sm:$0xff]
        %v474 = vld [vmem:[%s457 + $0xc0] sm:$0xff]
        %v475 = vld [vmem:[%s457 + $0xc8] sm:$0xff]
        %v476 = vld [vmem:[%s457 + $0xd8] sm:$0xff]
        %v477 = vld [vmem:[%s457 + $0xe0] sm:$0xff]
        %v478 = vld [vmem:[%s457 + $0xf0] sm:$0xff]
        %v479 = vld [vmem:[%s457 + $0xf8] sm:$0xff]
        %v480 = vld [vmem:[%s457 + $0x108] sm:$0xff]
        %v481 = vld [vmem:[%s457 + $0x110] sm:$0xff]
        %v482 = vld [vmem:[%s457 + $0x120] sm:$0xff]
        %v483 = vld [vmem:[%s457 + $0x128] sm:$0xff]
        %v484 = vld [vmem:[%s457 + $0x138] sm:$0xff]
        %v485 = vld [vmem:[%s457 + $0x140] sm:$0xff]
        %v486 = vld [vmem:[%s457 + $0x150] sm:$0xff]
        %v487 = vld [vmem:[%s457 + $0x158] sm:$0xff]
        %v488 = vld [vmem:[%s457 + $0x168] sm:$0xff]
        %v489 = vld [vmem:[%s457 + $0x170] sm:$0xff]
        %v490 = vld [vmem:[%s457 + $0x1] sm:$0xff]
        %v491 = vld [vmem:[%s457 + $0x9] sm:$0xff]
        %v492 = vld [vmem:[%s457 + $0x19] sm:$0xff]
        %v493 = vld [vmem:[%s457 + $0x21] sm:$0xff]
        %v494 = vld [vmem:[%s457 + $0x31] sm:$0xff]
        %v495 = vld [vmem:[%s457 + $0x39] sm:$0xff]
        %v496 = vld [vmem:[%s457 + $0x49] sm:$0xff]
        %v497 = vld [vmem:[%s457 + $0x51] sm:$0xff]
        %v498 = vld [vmem:[%s457 + $0x61] sm:$0xff]
        %v499 = vld [vmem:[%s457 + $0x69] sm:$0xff]
        %v500 = vld [vmem:[%s457 + $0x79] sm:$0xff]
        %v501 = vld [vmem:[%s457 + $0x81] sm:$0xff]
        %v502 = vld [vmem:[%s457 + $0x91] sm:$0xff]
        %v503 = vld [vmem:[%s457 + $0x99] sm:$0xff]
        %v504 = vld [vmem:[%s457 + $0xa9] sm:$0xff]
        %v505 = vld [vmem:[%s457 + $0xb1] sm:$0xff]
        %v506 = vld [vmem:[%s457 + $0xc1] sm:$0xff]
        %v507 = vld [vmem:[%s457 + $0xc9] sm:$0xff]
        %v508 = vld [vmem:[%s457 + $0xd9] sm:$0xff]
        %v509 = vld [vmem:[%s457 + $0xe1] sm:$0xff]
        %v510 = vld [vmem:[%s457 + $0xf1] sm:$0xff]
        %v511 = vld [vmem:[%s457 + $0xf9] sm:$0xff]
        %v512 = vld [vmem:[%s457 + $0x109] sm:$0xff]
        %v513 = vld [vmem:[%s457 + $0x111] sm:$0xff]
        %v514 = vld [vmem:[%s457 + $0x121] sm:$0xff]
        %v515 = vld [vmem:[%s457 + $0x129] sm:$0xff]
        %v516 = vld [vmem:[%s457 + $0x139] sm:$0xff]
        %v517 = vld [vmem:[%s457 + $0x141] sm:$0xff]
        %v518 = vld [vmem:[%s457 + $0x151] sm:$0xff]
        %v519 = vld [vmem:[%s457 + $0x159] sm:$0xff]
        %v520 = vld [vmem:[%s457 + $0x169] sm:$0xff]
        %v521 = vld [vmem:[%s457 + $0x171] sm:$0xff]
        %v522 = vld [vmem:[%s457 + $0x2] sm:$0xff]
        %v523 = vld [vmem:[%s457 + $0xa] sm:$0xff]
        %v524 = vld [vmem:[%s457 + $0x1a] sm:$0xff]
        %v525 = vld [vmem:[%s457 + $0x22] sm:$0xff]
        %v526 = vld [vmem:[%s457 + $0x32] sm:$0xff]
        %v527 = vld [vmem:[%s457 + $0x3a] sm:$0xff]
        %v528 = vld [vmem:[%s457 + $0x4a] sm:$0xff]
        %v529 = vld [vmem:[%s457 + $0x52] sm:$0xff]
        %v530 = vld [vmem:[%s457 + $0x62] sm:$0xff]
        %v531 = vld [vmem:[%s457 + $0x6a] sm:$0xff]
        %v532 = vld [vmem:[%s457 + $0x7a] sm:$0xff]
        %v533 = vld [vmem:[%s457 + $0x82] sm:$0xff]
        %v534 = vld [vmem:[%s457 + $0x92] sm:$0xff]
        %v535 = vld [vmem:[%s457 + $0x9a] sm:$0xff]
        %v536 = vld [vmem:[%s457 + $0xaa] sm:$0xff]
        %v537 = vld [vmem:[%s457 + $0xb2] sm:$0xff]
        %v538 = vld [vmem:[%s457 + $0xc2] sm:$0xff]
        %v539 = vld [vmem:[%s457 + $0xca] sm:$0xff]
        %v540 = vld [vmem:[%s457 + $0xda] sm:$0xff]
        %v541 = vld [vmem:[%s457 + $0xe2] sm:$0xff]
        %v542 = vld [vmem:[%s457 + $0xf2] sm:$0xff]
        %v543 = vld [vmem:[%s457 + $0xfa] sm:$0xff]
        %v544 = vld [vmem:[%s457 + $0x10a] sm:$0xff]
        %v545 = vld [vmem:[%s457 + $0x112] sm:$0xff]
        %v546 = vld [vmem:[%s457 + $0x122] sm:$0xff]
        %v547 = vld [vmem:[%s457 + $0x12a] sm:$0xff]
        %v548 = vld [vmem:[%s457 + $0x13a] sm:$0xff]
        %v549 = vld [vmem:[%s457 + $0x142] sm:$0xff]
        %v550 = vld [vmem:[%s457 + $0x152] sm:$0xff]
        %v551 = vld [vmem:[%s457 + $0x15a] sm:$0xff]
        %v552 = vld [vmem:[%s457 + $0x16a] sm:$0xff]
        %v553 = vld [vmem:[%s457 + $0x172] sm:$0xff]
        %s554 = sadd.s32 %s356, 2
        %s555 = smul.u32 %s554, 24
        %s556 = scalar_lea.vmem [#allocation2], %s555
        %v557 = vld [vmem:[%s556] sm:$0xff]
        %v558 = vld [vmem:[%s556 + $0x8] sm:$0xff]
        %v559 = vld [vmem:[%s556 + $0x18] sm:$0xff]
        %v560 = vld [vmem:[%s556 + $0x20] sm:$0xff]
        %v561 = vld [vmem:[%s556 + $0x30] sm:$0xff]
        %v562 = vld [vmem:[%s556 + $0x38] sm:$0xff]
        %v563 = vld [vmem:[%s556 + $0x48] sm:$0xff]
        %v564 = vld [vmem:[%s556 + $0x50] sm:$0xff]
        %v565 = vld [vmem:[%s556 + $0x60] sm:$0xff]
        %v566 = vld [vmem:[%s556 + $0x68] sm:$0xff]
        %v567 = vld [vmem:[%s556 + $0x78] sm:$0xff]
        %v568 = vld [vmem:[%s556 + $0x80] sm:$0xff]
        %v569 = vld [vmem:[%s556 + $0x90] sm:$0xff]
        %v570 = vld [vmem:[%s556 + $0x98] sm:$0xff]
        %v571 = vld [vmem:[%s556 + $0xa8] sm:$0xff]
        %v572 = vld [vmem:[%s556 + $0xb0] sm:$0xff]
        %v573 = vld [vmem:[%s556 + $0xc0] sm:$0xff]
        %v574 = vld [vmem:[%s556 + $0xc8] sm:$0xff]
        %v575 = vld [vmem:[%s556 + $0xd8] sm:$0xff]
        %v576 = vld [vmem:[%s556 + $0xe0] sm:$0xff]
        %v577 = vld [vmem:[%s556 + $0xf0] sm:$0xff]
        %v578 = vld [vmem:[%s556 + $0xf8] sm:$0xff]
        %v579 = vld [vmem:[%s556 + $0x108] sm:$0xff]
        %v580 = vld [vmem:[%s556 + $0x110] sm:$0xff]
        %v581 = vld [vmem:[%s556 + $0x120] sm:$0xff]
        %v582 = vld [vmem:[%s556 + $0x128] sm:$0xff]
        %v583 = vld [vmem:[%s556 + $0x138] sm:$0xff]
        %v584 = vld [vmem:[%s556 + $0x140] sm:$0xff]
        %v585 = vld [vmem:[%s556 + $0x150] sm:$0xff]
        %v586 = vld [vmem:[%s556 + $0x158] sm:$0xff]
        %v587 = vld [vmem:[%s556 + $0x168] sm:$0xff]
        %v588 = vld [vmem:[%s556 + $0x170] sm:$0xff]
        %v589 = vld [vmem:[%s556 + $0x1] sm:$0xff]
        %v590 = vld [vmem:[%s556 + $0x9] sm:$0xff]
        %v591 = vld [vmem:[%s556 + $0x19] sm:$0xff]
        %v592 = vld [vmem:[%s556 + $0x21] sm:$0xff]
        %v593 = vld [vmem:[%s556 + $0x31] sm:$0xff]
        %v594 = vld [vmem:[%s556 + $0x39] sm:$0xff]
        %v595 = vld [vmem:[%s556 + $0x49] sm:$0xff]
        %v596 = vld [vmem:[%s556 + $0x51] sm:$0xff]
        %v597 = vld [vmem:[%s556 + $0x61] sm:$0xff]
        %v598 = vld [vmem:[%s556 + $0x69] sm:$0xff]
        %v599 = vld [vmem:[%s556 + $0x79] sm:$0xff]
        %v600 = vld [vmem:[%s556 + $0x81] sm:$0xff]
        %v601 = vld [vmem:[%s556 + $0x91] sm:$0xff]
        %v602 = vld [vmem:[%s556 + $0x99] sm:$0xff]
        %v603 = vld [vmem:[%s556 + $0xa9] sm:$0xff]
        %v604 = vld [vmem:[%s556 + $0xb1] sm:$0xff]
        %v605 = vld [vmem:[%s556 + $0xc1] sm:$0xff]
        %v606 = vld [vmem:[%s556 + $0xc9] sm:$0xff]
        %v607 = vld [vmem:[%s556 + $0xd9] sm:$0xff]
        %v608 = vld [vmem:[%s556 + $0xe1] sm:$0xff]
        %v609 = vld [vmem:[%s556 + $0xf1] sm:$0xff]
        %v610 = vld [vmem:[%s556 + $0xf9] sm:$0xff]
        %v611 = vld [vmem:[%s556 + $0x109] sm:$0xff]
        %v612 = vld [vmem:[%s556 + $0x111] sm:$0xff]
        %v613 = vld [vmem:[%s556 + $0x121] sm:$0xff]
        %v614 = vld [vmem:[%s556 + $0x129] sm:$0xff]
        %v615 = vld [vmem:[%s556 + $0x139] sm:$0xff]
        %v616 = vld [vmem:[%s556 + $0x141] sm:$0xff]
        %v617 = vld [vmem:[%s556 + $0x151] sm:$0xff]
        %v618 = vld [vmem:[%s556 + $0x159] sm:$0xff]
        %v619 = vld [vmem:[%s556 + $0x169] sm:$0xff]
        %v620 = vld [vmem:[%s556 + $0x171] sm:$0xff]
        %v621 = vld [vmem:[%s556 + $0x2] sm:$0xff]
        %v622 = vld [vmem:[%s556 + $0xa] sm:$0xff]
        %v623 = vld [vmem:[%s556 + $0x1a] sm:$0xff]
        %v624 = vld [vmem:[%s556 + $0x22] sm:$0xff]
        %v625 = vld [vmem:[%s556 + $0x32] sm:$0xff]
        %v626 = vld [vmem:[%s556 + $0x3a] sm:$0xff]
        %v627 = vld [vmem:[%s556 + $0x4a] sm:$0xff]
        %v628 = vld [vmem:[%s556 + $0x52] sm:$0xff]
        %v629 = vld [vmem:[%s556 + $0x62] sm:$0xff]
        %v630 = vld [vmem:[%s556 + $0x6a] sm:$0xff]
        %v631 = vld [vmem:[%s556 + $0x7a] sm:$0xff]
        %v632 = vld [vmem:[%s556 + $0x82] sm:$0xff]
        %v633 = vld [vmem:[%s556 + $0x92] sm:$0xff]
        %v634 = vld [vmem:[%s556 + $0x9a] sm:$0xff]
        %v635 = vld [vmem:[%s556 + $0xaa] sm:$0xff]
        %v636 = vld [vmem:[%s556 + $0xb2] sm:$0xff]
        %v637 = vld [vmem:[%s556 + $0xc2] sm:$0xff]
        %v638 = vld [vmem:[%s556 + $0xca] sm:$0xff]
        %v639 = vld [vmem:[%s556 + $0xda] sm:$0xff]
        %v640 = vld [vmem:[%s556 + $0xe2] sm:$0xff]
        %v641 = vld [vmem:[%s556 + $0xf2] sm:$0xff]
        %v642 = vld [vmem:[%s556 + $0xfa] sm:$0xff]
        %v643 = vld [vmem:[%s556 + $0x10a] sm:$0xff]
        %v644 = vld [vmem:[%s556 + $0x112] sm:$0xff]
        %v645 = vld [vmem:[%s556 + $0x122] sm:$0xff]
        %v646 = vld [vmem:[%s556 + $0x12a] sm:$0xff]
        %v647 = vld [vmem:[%s556 + $0x13a] sm:$0xff]
        %v648 = vld [vmem:[%s556 + $0x142] sm:$0xff]
        %v649 = vld [vmem:[%s556 + $0x152] sm:$0xff]
        %v650 = vld [vmem:[%s556 + $0x15a] sm:$0xff]
        %v651 = vld [vmem:[%s556 + $0x16a] sm:$0xff]
        %v652 = vld [vmem:[%s556 + $0x172] sm:$0xff]
        %685 = vrot.lane.b32.xlu0 %v391, 4
        %v686 = vpop.permute.xlu0 %685
        %687 = vrot.lane.b32.xlu0 %v392, 4
        %v688 = vpop.permute.xlu0 %687
        %689 = vrot.lane.b32.xlu0 %v393, 4
        %v690 = vpop.permute.xlu0 %689
        %691 = vrot.lane.b32.xlu0 %v394, 4
        %v692 = vpop.permute.xlu0 %691
        %693 = vrot.lane.b32.xlu0 %v395, 4
        %v694 = vpop.permute.xlu0 %693
        %695 = vrot.lane.b32.xlu0 %v396, 4
        %v696 = vpop.permute.xlu0 %695
        %697 = vrot.lane.b32.xlu0 %v397, 4
        %v698 = vpop.permute.xlu0 %697
        %699 = vrot.lane.b32.xlu0 %v398, 4
        %v700 = vpop.permute.xlu0 %699
        %701 = vrot.lane.b32.xlu0 %v399, 4
        %v702 = vpop.permute.xlu0 %701
        %703 = vrot.lane.b32.xlu0 %v400, 4
        %v704 = vpop.permute.xlu0 %703
        %705 = vrot.lane.b32.xlu0 %v401, 4
        %v706 = vpop.permute.xlu0 %705
        %707 = vrot.lane.b32.xlu0 %v402, 4
        %v708 = vpop.permute.xlu0 %707
        %709 = vrot.lane.b32.xlu0 %v403, 4
        %v710 = vpop.permute.xlu0 %709
        %711 = vrot.lane.b32.xlu0 %v404, 4
        %v712 = vpop.permute.xlu0 %711
        %713 = vrot.lane.b32.xlu0 %v405, 4
        %v714 = vpop.permute.xlu0 %713
        %715 = vrot.lane.b32.xlu0 %v406, 4
        %v716 = vpop.permute.xlu0 %715
        %717 = vrot.lane.b32.xlu0 %v407, 4
        %v718 = vpop.permute.xlu0 %717
        %719 = vrot.lane.b32.xlu0 %v408, 4
        %v720 = vpop.permute.xlu0 %719
        %721 = vrot.lane.b32.xlu0 %v409, 4
        %v722 = vpop.permute.xlu0 %721
        %723 = vrot.lane.b32.xlu0 %v410, 4
        %v724 = vpop.permute.xlu0 %723
        %725 = vrot.lane.b32.xlu0 %v411, 4
        %v726 = vpop.permute.xlu0 %725
        %727 = vrot.lane.b32.xlu0 %v412, 4
        %v728 = vpop.permute.xlu0 %727
        %729 = vrot.lane.b32.xlu0 %v413, 4
        %v730 = vpop.permute.xlu0 %729
        %731 = vrot.lane.b32.xlu0 %v414, 4
        %v732 = vpop.permute.xlu0 %731
        %733 = vrot.lane.b32.xlu0 %v415, 4
        %v734 = vpop.permute.xlu0 %733
        %735 = vrot.lane.b32.xlu0 %v416, 4
        %v736 = vpop.permute.xlu0 %735
        %737 = vrot.lane.b32.xlu0 %v417, 4
        %v738 = vpop.permute.xlu0 %737
        %739 = vrot.lane.b32.xlu0 %v418, 4
        %v740 = vpop.permute.xlu0 %739
        %741 = vrot.lane.b32.xlu0 %v419, 4
        %v742 = vpop.permute.xlu0 %741
        %743 = vrot.lane.b32.xlu0 %v420, 4
        %v744 = vpop.permute.xlu0 %743
        %745 = vrot.lane.b32.xlu0 %v421, 4
        %v746 = vpop.permute.xlu0 %745
        %747 = vrot.lane.b32.xlu0 %v422, 4
        %v748 = vpop.permute.xlu0 %747
        %813 = vrot.lane.b32.xlu0 %v423, 8
        %v814 = vpop.permute.xlu0 %813
        %815 = vrot.lane.b32.xlu0 %v424, 8
        %v816 = vpop.permute.xlu0 %815
        %817 = vrot.lane.b32.xlu0 %v425, 8
        %v818 = vpop.permute.xlu0 %817
        %819 = vrot.lane.b32.xlu0 %v426, 8
        %v820 = vpop.permute.xlu0 %819
        %821 = vrot.lane.b32.xlu0 %v427, 8
        %v822 = vpop.permute.xlu0 %821
        %823 = vrot.lane.b32.xlu0 %v428, 8
        %v824 = vpop.permute.xlu0 %823
        %825 = vrot.lane.b32.xlu0 %v429, 8
        %v826 = vpop.permute.xlu0 %825
        %827 = vrot.lane.b32.xlu0 %v430, 8
        %v828 = vpop.permute.xlu0 %827
        %829 = vrot.lane.b32.xlu0 %v431, 8
        %v830 = vpop.permute.xlu0 %829
        %831 = vrot.lane.b32.xlu0 %v432, 8
        %v832 = vpop.permute.xlu0 %831
        %833 = vrot.lane.b32.xlu0 %v433, 8
        %v834 = vpop.permute.xlu0 %833
        %835 = vrot.lane.b32.xlu0 %v434, 8
        %v836 = vpop.permute.xlu0 %835
        %837 = vrot.lane.b32.xlu0 %v435, 8
        %v838 = vpop.permute.xlu0 %837
        %839 = vrot.lane.b32.xlu0 %v436, 8
        %v840 = vpop.permute.xlu0 %839
        %841 = vrot.lane.b32.xlu0 %v437, 8
        %v842 = vpop.permute.xlu0 %841
        %843 = vrot.lane.b32.xlu0 %v438, 8
        %v844 = vpop.permute.xlu0 %843
        %845 = vrot.lane.b32.xlu0 %v439, 8
        %v846 = vpop.permute.xlu0 %845
        %847 = vrot.lane.b32.xlu0 %v440, 8
        %v848 = vpop.permute.xlu0 %847
        %849 = vrot.lane.b32.xlu0 %v441, 8
        %v850 = vpop.permute.xlu0 %849
        %851 = vrot.lane.b32.xlu0 %v442, 8
        %v852 = vpop.permute.xlu0 %851
        %853 = vrot.lane.b32.xlu0 %v443, 8
        %v854 = vpop.permute.xlu0 %853
        %855 = vrot.lane.b32.xlu0 %v444, 8
        %v856 = vpop.permute.xlu0 %855
        %857 = vrot.lane.b32.xlu0 %v445, 8
        %v858 = vpop.permute.xlu0 %857
        %859 = vrot.lane.b32.xlu0 %v446, 8
        %v860 = vpop.permute.xlu0 %859
        %861 = vrot.lane.b32.xlu0 %v447, 8
        %v862 = vpop.permute.xlu0 %861
        %863 = vrot.lane.b32.xlu0 %v448, 8
        %v864 = vpop.permute.xlu0 %863
        %865 = vrot.lane.b32.xlu0 %v449, 8
        %v866 = vpop.permute.xlu0 %865
        %867 = vrot.lane.b32.xlu0 %v450, 8
        %v868 = vpop.permute.xlu0 %867
        %869 = vrot.lane.b32.xlu0 %v451, 8
        %v870 = vpop.permute.xlu0 %869
        %871 = vrot.lane.b32.xlu0 %v452, 8
        %v872 = vpop.permute.xlu0 %871
        %873 = vrot.lane.b32.xlu0 %v453, 8
        %v874 = vpop.permute.xlu0 %873
        %875 = vrot.lane.b32.xlu0 %v454, 8
        %v876 = vpop.permute.xlu0 %875
        %941 = vrot.lane.b32.xlu0 %v458, 12
        %v942 = vpop.permute.xlu0 %941
        %943 = vrot.lane.b32.xlu0 %v459, 12
        %v944 = vpop.permute.xlu0 %943
        %945 = vrot.lane.b32.xlu0 %v460, 12
        %v946 = vpop.permute.xlu0 %945
        %947 = vrot.lane.b32.xlu0 %v461, 12
        %v948 = vpop.permute.xlu0 %947
        %949 = vrot.lane.b32.xlu0 %v462, 12
        %v950 = vpop.permute.xlu0 %949
        %951 = vrot.lane.b32.xlu0 %v463, 12
        %v952 = vpop.permute.xlu0 %951
        %953 = vrot.lane.b32.xlu0 %v464, 12
        %v954 = vpop.permute.xlu0 %953
        %955 = vrot.lane.b32.xlu0 %v465, 12
        %v956 = vpop.permute.xlu0 %955
        %957 = vrot.lane.b32.xlu0 %v466, 12
        %v958 = vpop.permute.xlu0 %957
        %959 = vrot.lane.b32.xlu0 %v467, 12
        %v960 = vpop.permute.xlu0 %959
        %961 = vrot.lane.b32.xlu0 %v468, 12
        %v962 = vpop.permute.xlu0 %961
        %963 = vrot.lane.b32.xlu0 %v469, 12
        %v964 = vpop.permute.xlu0 %963
        %965 = vrot.lane.b32.xlu0 %v470, 12
        %v966 = vpop.permute.xlu0 %965
        %967 = vrot.lane.b32.xlu0 %v471, 12
        %v968 = vpop.permute.xlu0 %967
        %969 = vrot.lane.b32.xlu0 %v472, 12
        %v970 = vpop.permute.xlu0 %969
        %971 = vrot.lane.b32.xlu0 %v473, 12
        %v972 = vpop.permute.xlu0 %971
        %973 = vrot.lane.b32.xlu0 %v474, 12
        %v974 = vpop.permute.xlu0 %973
        %975 = vrot.lane.b32.xlu0 %v475, 12
        %v976 = vpop.permute.xlu0 %975
        %977 = vrot.lane.b32.xlu0 %v476, 12
        %v978 = vpop.permute.xlu0 %977
        %979 = vrot.lane.b32.xlu0 %v477, 12
        %v980 = vpop.permute.xlu0 %979
        %981 = vrot.lane.b32.xlu0 %v478, 12
        %v982 = vpop.permute.xlu0 %981
        %983 = vrot.lane.b32.xlu0 %v479, 12
        %v984 = vpop.permute.xlu0 %983
        %985 = vrot.lane.b32.xlu0 %v480, 12
        %v986 = vpop.permute.xlu0 %985
        %987 = vrot.lane.b32.xlu0 %v481, 12
        %v988 = vpop.permute.xlu0 %987
        %989 = vrot.lane.b32.xlu0 %v482, 12
        %v990 = vpop.permute.xlu0 %989
        %991 = vrot.lane.b32.xlu0 %v483, 12
        %v992 = vpop.permute.xlu0 %991
        %993 = vrot.lane.b32.xlu0 %v484, 12
        %v994 = vpop.permute.xlu0 %993
        %995 = vrot.lane.b32.xlu0 %v485, 12
        %v996 = vpop.permute.xlu0 %995
        %997 = vrot.lane.b32.xlu0 %v486, 12
        %v998 = vpop.permute.xlu0 %997
        %999 = vrot.lane.b32.xlu0 %v487, 12
        %v1000 = vpop.permute.xlu0 %999
        %1001 = vrot.lane.b32.xlu0 %v488, 12
        %v1002 = vpop.permute.xlu0 %1001
        %1003 = vrot.lane.b32.xlu0 %v489, 12
        %v1004 = vpop.permute.xlu0 %1003
        %1069 = vrot.lane.b32.xlu0 %v490, 16
        %v1070 = vpop.permute.xlu0 %1069
        %1071 = vrot.lane.b32.xlu0 %v491, 16
        %v1072 = vpop.permute.xlu0 %1071
        %1073 = vrot.lane.b32.xlu0 %v492, 16
        %v1074 = vpop.permute.xlu0 %1073
        %1075 = vrot.lane.b32.xlu0 %v493, 16
        %v1076 = vpop.permute.xlu0 %1075
        %1077 = vrot.lane.b32.xlu0 %v494, 16
        %v1078 = vpop.permute.xlu0 %1077
        %1079 = vrot.lane.b32.xlu0 %v495, 16
        %v1080 = vpop.permute.xlu0 %1079
        %1081 = vrot.lane.b32.xlu0 %v496, 16
        %v1082 = vpop.permute.xlu0 %1081
        %1083 = vrot.lane.b32.xlu0 %v497, 16
        %v1084 = vpop.permute.xlu0 %1083
        %1085 = vrot.lane.b32.xlu0 %v498, 16
        %v1086 = vpop.permute.xlu0 %1085
        %1087 = vrot.lane.b32.xlu0 %v499, 16
        %v1088 = vpop.permute.xlu0 %1087
        %1089 = vrot.lane.b32.xlu0 %v500, 16
        %v1090 = vpop.permute.xlu0 %1089
        %1091 = vrot.lane.b32.xlu0 %v501, 16
        %v1092 = vpop.permute.xlu0 %1091
        %1093 = vrot.lane.b32.xlu0 %v502, 16
        %v1094 = vpop.permute.xlu0 %1093
        %1095 = vrot.lane.b32.xlu0 %v503, 16
        %v1096 = vpop.permute.xlu0 %1095
        %1097 = vrot.lane.b32.xlu0 %v504, 16
        %v1098 = vpop.permute.xlu0 %1097
        %1099 = vrot.lane.b32.xlu0 %v505, 16
        %v1100 = vpop.permute.xlu0 %1099
        %1101 = vrot.lane.b32.xlu0 %v506, 16
        %v1102 = vpop.permute.xlu0 %1101
        %1103 = vrot.lane.b32.xlu0 %v507, 16
        %v1104 = vpop.permute.xlu0 %1103
        %1105 = vrot.lane.b32.xlu0 %v508, 16
        %v1106 = vpop.permute.xlu0 %1105
        %1107 = vrot.lane.b32.xlu0 %v509, 16
        %v1108 = vpop.permute.xlu0 %1107
        %1109 = vrot.lane.b32.xlu0 %v510, 16
        %v1110 = vpop.permute.xlu0 %1109
        %1111 = vrot.lane.b32.xlu0 %v511, 16
        %v1112 = vpop.permute.xlu0 %1111
        %1113 = vrot.lane.b32.xlu0 %v512, 16
        %v1114 = vpop.permute.xlu0 %1113
        %1115 = vrot.lane.b32.xlu0 %v513, 16
        %v1116 = vpop.permute.xlu0 %1115
        %1117 = vrot.lane.b32.xlu0 %v514, 16
        %v1118 = vpop.permute.xlu0 %1117
        %1119 = vrot.lane.b32.xlu0 %v515, 16
        %v1120 = vpop.permute.xlu0 %1119
        %1121 = vrot.lane.b32.xlu0 %v516, 16
        %v1122 = vpop.permute.xlu0 %1121
        %1123 = vrot.lane.b32.xlu0 %v517, 16
        %v1124 = vpop.permute.xlu0 %1123
        %1125 = vrot.lane.b32.xlu0 %v518, 16
        %v1126 = vpop.permute.xlu0 %1125
        %1127 = vrot.lane.b32.xlu0 %v519, 16
        %v1128 = vpop.permute.xlu0 %1127
        %1129 = vrot.lane.b32.xlu0 %v520, 16
        %v1130 = vpop.permute.xlu0 %1129
        %1131 = vrot.lane.b32.xlu0 %v521, 16
        %v1132 = vpop.permute.xlu0 %1131
        %1197 = vrot.lane.b32.xlu0 %v522, 20
        %v1198 = vpop.permute.xlu0 %1197
        %1199 = vrot.lane.b32.xlu0 %v523, 20
        %v1200 = vpop.permute.xlu0 %1199
        %1201 = vrot.lane.b32.xlu0 %v524, 20
        %v1202 = vpop.permute.xlu0 %1201
        %1203 = vrot.lane.b32.xlu0 %v525, 20
        %v1204 = vpop.permute.xlu0 %1203
        %1205 = vrot.lane.b32.xlu0 %v526, 20
        %v1206 = vpop.permute.xlu0 %1205
        %1207 = vrot.lane.b32.xlu0 %v527, 20
        %v1208 = vpop.permute.xlu0 %1207
        %1209 = vrot.lane.b32.xlu0 %v528, 20
        %v1210 = vpop.permute.xlu0 %1209
        %1211 = vrot.lane.b32.xlu0 %v529, 20
        %v1212 = vpop.permute.xlu0 %1211
        %1213 = vrot.lane.b32.xlu0 %v530, 20
        %v1214 = vpop.permute.xlu0 %1213
        %1215 = vrot.lane.b32.xlu0 %v531, 20
        %v1216 = vpop.permute.xlu0 %1215
        %1217 = vrot.lane.b32.xlu0 %v532, 20
        %v1218 = vpop.permute.xlu0 %1217
        %1219 = vrot.lane.b32.xlu0 %v533, 20
        %v1220 = vpop.permute.xlu0 %1219
        %1221 = vrot.lane.b32.xlu0 %v534, 20
        %v1222 = vpop.permute.xlu0 %1221
        %1223 = vrot.lane.b32.xlu0 %v535, 20
        %v1224 = vpop.permute.xlu0 %1223
        %1225 = vrot.lane.b32.xlu0 %v536, 20
        %v1226 = vpop.permute.xlu0 %1225
        %1227 = vrot.lane.b32.xlu0 %v537, 20
        %v1228 = vpop.permute.xlu0 %1227
        %1229 = vrot.lane.b32.xlu0 %v538, 20
        %v1230 = vpop.permute.xlu0 %1229
        %1231 = vrot.lane.b32.xlu0 %v539, 20
        %v1232 = vpop.permute.xlu0 %1231
        %1233 = vrot.lane.b32.xlu0 %v540, 20
        %v1234 = vpop.permute.xlu0 %1233
        %1235 = vrot.lane.b32.xlu0 %v541, 20
        %v1236 = vpop.permute.xlu0 %1235
        %1237 = vrot.lane.b32.xlu0 %v542, 20
        %v1238 = vpop.permute.xlu0 %1237
        %1239 = vrot.lane.b32.xlu0 %v543, 20
        %v1240 = vpop.permute.xlu0 %1239
        %1241 = vrot.lane.b32.xlu0 %v544, 20
        %v1242 = vpop.permute.xlu0 %1241
        %1243 = vrot.lane.b32.xlu0 %v545, 20
        %v1244 = vpop.permute.xlu0 %1243
        %1245 = vrot.lane.b32.xlu0 %v546, 20
        %v1246 = vpop.permute.xlu0 %1245
        %1247 = vrot.lane.b32.xlu0 %v547, 20
        %v1248 = vpop.permute.xlu0 %1247
        %1249 = vrot.lane.b32.xlu0 %v548, 20
        %v1250 = vpop.permute.xlu0 %1249
        %1251 = vrot.lane.b32.xlu0 %v549, 20
        %v1252 = vpop.permute.xlu0 %1251
        %1253 = vrot.lane.b32.xlu0 %v550, 20
        %v1254 = vpop.permute.xlu0 %1253
        %1255 = vrot.lane.b32.xlu0 %v551, 20
        %v1256 = vpop.permute.xlu0 %1255
        %1257 = vrot.lane.b32.xlu0 %v552, 20
        %v1258 = vpop.permute.xlu0 %1257
        %1259 = vrot.lane.b32.xlu0 %v553, 20
        %v1260 = vpop.permute.xlu0 %1259
        %1325 = vrot.lane.b32.xlu0 %v557, 24
        %v1326 = vpop.permute.xlu0 %1325
        %1327 = vrot.lane.b32.xlu0 %v558, 24
        %v1328 = vpop.permute.xlu0 %1327
        %1329 = vrot.lane.b32.xlu0 %v559, 24
        %v1330 = vpop.permute.xlu0 %1329
        %1331 = vrot.lane.b32.xlu0 %v560, 24
        %v1332 = vpop.permute.xlu0 %1331
        %1333 = vrot.lane.b32.xlu0 %v561, 24
        %v1334 = vpop.permute.xlu0 %1333
        %1335 = vrot.lane.b32.xlu0 %v562, 24
        %v1336 = vpop.permute.xlu0 %1335
        %1337 = vrot.lane.b32.xlu0 %v563, 24
        %v1338 = vpop.permute.xlu0 %1337
        %1339 = vrot.lane.b32.xlu0 %v564, 24
        %v1340 = vpop.permute.xlu0 %1339
        %1341 = vrot.lane.b32.xlu0 %v565, 24
        %v1342 = vpop.permute.xlu0 %1341
        %1343 = vrot.lane.b32.xlu0 %v566, 24
        %v1344 = vpop.permute.xlu0 %1343
        %1345 = vrot.lane.b32.xlu0 %v567, 24
        %v1346 = vpop.permute.xlu0 %1345
        %1347 = vrot.lane.b32.xlu0 %v568, 24
        %v1348 = vpop.permute.xlu0 %1347
        %1349 = vrot.lane.b32.xlu0 %v569, 24
        %v1350 = vpop.permute.xlu0 %1349
        %1351 = vrot.lane.b32.xlu0 %v570, 24
        %v1352 = vpop.permute.xlu0 %1351
        %1353 = vrot.lane.b32.xlu0 %v571, 24
        %v1354 = vpop.permute.xlu0 %1353
        %1355 = vrot.lane.b32.xlu0 %v572, 24
        %v1356 = vpop.permute.xlu0 %1355
        %1357 = vrot.lane.b32.xlu0 %v573, 24
        %v1358 = vpop.permute.xlu0 %1357
        %1359 = vrot.lane.b32.xlu0 %v574, 24
        %v1360 = vpop.permute.xlu0 %1359
        %1361 = vrot.lane.b32.xlu0 %v575, 24
        %v1362 = vpop.permute.xlu0 %1361
        %1363 = vrot.lane.b32.xlu0 %v576, 24
        %v1364 = vpop.permute.xlu0 %1363
        %1365 = vrot.lane.b32.xlu0 %v577, 24
        %v1366 = vpop.permute.xlu0 %1365
        %1367 = vrot.lane.b32.xlu0 %v578, 24
        %v1368 = vpop.permute.xlu0 %1367
        %1369 = vrot.lane.b32.xlu0 %v579, 24
        %v1370 = vpop.permute.xlu0 %1369
        %1371 = vrot.lane.b32.xlu0 %v580, 24
        %v1372 = vpop.permute.xlu0 %1371
        %1373 = vrot.lane.b32.xlu0 %v581, 24
        %v1374 = vpop.permute.xlu0 %1373
        %1375 = vrot.lane.b32.xlu0 %v582, 24
        %v1376 = vpop.permute.xlu0 %1375
        %1377 = vrot.lane.b32.xlu0 %v583, 24
        %v1378 = vpop.permute.xlu0 %1377
        %1379 = vrot.lane.b32.xlu0 %v584, 24
        %v1380 = vpop.permute.xlu0 %1379
        %1381 = vrot.lane.b32.xlu0 %v585, 24
        %v1382 = vpop.permute.xlu0 %1381
        %1383 = vrot.lane.b32.xlu0 %v586, 24
        %v1384 = vpop.permute.xlu0 %1383
        %1385 = vrot.lane.b32.xlu0 %v587, 24
        %v1386 = vpop.permute.xlu0 %1385
        %1387 = vrot.lane.b32.xlu0 %v588, 24
        %v1388 = vpop.permute.xlu0 %1387
        %1453 = vrot.lane.b32.xlu0 %v589, 28
        %v1454 = vpop.permute.xlu0 %1453
        %1455 = vrot.lane.b32.xlu0 %v590, 28
        %v1456 = vpop.permute.xlu0 %1455
        %1457 = vrot.lane.b32.xlu0 %v591, 28
        %v1458 = vpop.permute.xlu0 %1457
        %1459 = vrot.lane.b32.xlu0 %v592, 28
        %v1460 = vpop.permute.xlu0 %1459
        %1461 = vrot.lane.b32.xlu0 %v593, 28
        %v1462 = vpop.permute.xlu0 %1461
        %1463 = vrot.lane.b32.xlu0 %v594, 28
        %v1464 = vpop.permute.xlu0 %1463
        %1465 = vrot.lane.b32.xlu0 %v595, 28
        %v1466 = vpop.permute.xlu0 %1465
        %1467 = vrot.lane.b32.xlu0 %v596, 28
        %v1468 = vpop.permute.xlu0 %1467
        %1469 = vrot.lane.b32.xlu0 %v597, 28
        %v1470 = vpop.permute.xlu0 %1469
        %1471 = vrot.lane.b32.xlu0 %v598, 28
        %v1472 = vpop.permute.xlu0 %1471
        %1473 = vrot.lane.b32.xlu0 %v599, 28
        %v1474 = vpop.permute.xlu0 %1473
        %1475 = vrot.lane.b32.xlu0 %v600, 28
        %v1476 = vpop.permute.xlu0 %1475
        %1477 = vrot.lane.b32.xlu0 %v601, 28
        %v1478 = vpop.permute.xlu0 %1477
        %1479 = vrot.lane.b32.xlu0 %v602, 28
        %v1480 = vpop.permute.xlu0 %1479
        %1481 = vrot.lane.b32.xlu0 %v603, 28
        %v1482 = vpop.permute.xlu0 %1481
        %1483 = vrot.lane.b32.xlu0 %v604, 28
        %v1484 = vpop.permute.xlu0 %1483
        %1485 = vrot.lane.b32.xlu0 %v605, 28
        %v1486 = vpop.permute.xlu0 %1485
        %1487 = vrot.lane.b32.xlu0 %v606, 28
        %v1488 = vpop.permute.xlu0 %1487
        %1489 = vrot.lane.b32.xlu0 %v607, 28
        %v1490 = vpop.permute.xlu0 %1489
        %1491 = vrot.lane.b32.xlu0 %v608, 28
        %v1492 = vpop.permute.xlu0 %1491
        %1493 = vrot.lane.b32.xlu0 %v609, 28
        %v1494 = vpop.permute.xlu0 %1493
        %1495 = vrot.lane.b32.xlu0 %v610, 28
        %v1496 = vpop.permute.xlu0 %1495
        %1497 = vrot.lane.b32.xlu0 %v611, 28
        %v1498 = vpop.permute.xlu0 %1497
        %1499 = vrot.lane.b32.xlu0 %v612, 28
        %v1500 = vpop.permute.xlu0 %1499
        %1501 = vrot.lane.b32.xlu0 %v613, 28
        %v1502 = vpop.permute.xlu0 %1501
        %1503 = vrot.lane.b32.xlu0 %v614, 28
        %v1504 = vpop.permute.xlu0 %1503
        %1505 = vrot.lane.b32.xlu0 %v615, 28
        %v1506 = vpop.permute.xlu0 %1505
        %1507 = vrot.lane.b32.xlu0 %v616, 28
        %v1508 = vpop.permute.xlu0 %1507
        %1509 = vrot.lane.b32.xlu0 %v617, 28
        %v1510 = vpop.permute.xlu0 %1509
        %1511 = vrot.lane.b32.xlu0 %v618, 28
        %v1512 = vpop.permute.xlu0 %1511
        %1513 = vrot.lane.b32.xlu0 %v619, 28
        %v1514 = vpop.permute.xlu0 %1513
        %1515 = vrot.lane.b32.xlu0 %v620, 28
        %v1516 = vpop.permute.xlu0 %1515
        %1581 = vrot.lane.b32.xlu0 %v621, 32
        %v1582 = vpop.permute.xlu0 %1581
        %1583 = vrot.lane.b32.xlu0 %v622, 32
        %v1584 = vpop.permute.xlu0 %1583
        %1585 = vrot.lane.b32.xlu0 %v623, 32
        %v1586 = vpop.permute.xlu0 %1585
        %1587 = vrot.lane.b32.xlu0 %v624, 32
        %v1588 = vpop.permute.xlu0 %1587
        %1589 = vrot.lane.b32.xlu0 %v625, 32
        %v1590 = vpop.permute.xlu0 %1589
        %1591 = vrot.lane.b32.xlu0 %v626, 32
        %v1592 = vpop.permute.xlu0 %1591
        %1593 = vrot.lane.b32.xlu0 %v627, 32
        %v1594 = vpop.permute.xlu0 %1593
        %1595 = vrot.lane.b32.xlu0 %v628, 32
        %v1596 = vpop.permute.xlu0 %1595
        %1597 = vrot.lane.b32.xlu0 %v629, 32
        %v1598 = vpop.permute.xlu0 %1597
        %1599 = vrot.lane.b32.xlu0 %v630, 32
        %v1600 = vpop.permute.xlu0 %1599
        %1601 = vrot.lane.b32.xlu0 %v631, 32
        %v1602 = vpop.permute.xlu0 %1601
        %1603 = vrot.lane.b32.xlu0 %v632, 32
        %v1604 = vpop.permute.xlu0 %1603
        %1605 = vrot.lane.b32.xlu0 %v633, 32
        %v1606 = vpop.permute.xlu0 %1605
        %1607 = vrot.lane.b32.xlu0 %v634, 32
        %v1608 = vpop.permute.xlu0 %1607
        %1609 = vrot.lane.b32.xlu0 %v635, 32
        %v1610 = vpop.permute.xlu0 %1609
        %1611 = vrot.lane.b32.xlu0 %v636, 32
        %v1612 = vpop.permute.xlu0 %1611
        %1613 = vrot.lane.b32.xlu0 %v637, 32
        %v1614 = vpop.permute.xlu0 %1613
        %1615 = vrot.lane.b32.xlu0 %v638, 32
        %v1616 = vpop.permute.xlu0 %1615
        %1617 = vrot.lane.b32.xlu0 %v639, 32
        %v1618 = vpop.permute.xlu0 %1617
        %1619 = vrot.lane.b32.xlu0 %v640, 32
        %v1620 = vpop.permute.xlu0 %1619
        %1621 = vrot.lane.b32.xlu0 %v641, 32
        %v1622 = vpop.permute.xlu0 %1621
        %1623 = vrot.lane.b32.xlu0 %v642, 32
        %v1624 = vpop.permute.xlu0 %1623
        %1625 = vrot.lane.b32.xlu0 %v643, 32
        %v1626 = vpop.permute.xlu0 %1625
        %1627 = vrot.lane.b32.xlu0 %v644, 32
        %v1628 = vpop.permute.xlu0 %1627
        %1629 = vrot.lane.b32.xlu0 %v645, 32
        %v1630 = vpop.permute.xlu0 %1629
        %1631 = vrot.lane.b32.xlu0 %v646, 32
        %v1632 = vpop.permute.xlu0 %1631
        %1633 = vrot.lane.b32.xlu0 %v647, 32
        %v1634 = vpop.permute.xlu0 %1633
        %1635 = vrot.lane.b32.xlu0 %v648, 32
        %v1636 = vpop.permute.xlu0 %1635
        %1637 = vrot.lane.b32.xlu0 %v649, 32
        %v1638 = vpop.permute.xlu0 %1637
        %1639 = vrot.lane.b32.xlu0 %v650, 32
        %v1640 = vpop.permute.xlu0 %1639
        %1641 = vrot.lane.b32.xlu0 %v651, 32
        %v1642 = vpop.permute.xlu0 %1641
        %1643 = vrot.lane.b32.xlu0 %v652, 32
        %v1644 = vpop.permute.xlu0 %1643
        %vm1677 = vcmask 31744
        %v1678 = vsel %vm1677, %v359, %v686
        %v1679 = vsel %vm1677, %v360, %v688
        %v1680 = vsel %vm1677, %v361, %v690
        %v1681 = vsel %vm1677, %v362, %v692
        %v1682 = vsel %vm1677, %v363, %v694
        %v1683 = vsel %vm1677, %v364, %v696
        %v1684 = vsel %vm1677, %v365, %v698
        %v1685 = vsel %vm1677, %v366, %v700
        %v1686 = vsel %vm1677, %v367, %v702
        %v1687 = vsel %vm1677, %v368, %v704
        %v1688 = vsel %vm1677, %v369, %v706
        %v1689 = vsel %vm1677, %v370, %v708
        %v1690 = vsel %vm1677, %v371, %v710
        %v1691 = vsel %vm1677, %v372, %v712
        %v1692 = vsel %vm1677, %v373, %v714
        %v1693 = vsel %vm1677, %v374, %v716
        %v1694 = vsel %vm1677, %v375, %v718
        %v1695 = vsel %vm1677, %v376, %v720
        %v1696 = vsel %vm1677, %v377, %v722
        %v1697 = vsel %vm1677, %v378, %v724
        %v1698 = vsel %vm1677, %v379, %v726
        %v1699 = vsel %vm1677, %v380, %v728
        %v1700 = vsel %vm1677, %v381, %v730
        %v1701 = vsel %vm1677, %v382, %v732
        %v1702 = vsel %vm1677, %v383, %v734
        %v1703 = vsel %vm1677, %v384, %v736
        %v1704 = vsel %vm1677, %v385, %v738
        %v1705 = vsel %vm1677, %v386, %v740
        %v1706 = vsel %vm1677, %v387, %v742
        %v1707 = vsel %vm1677, %v388, %v744
        %v1708 = vsel %vm1677, %v389, %v746
        %v1709 = vsel %vm1677, %v390, %v748
        %vm1710 = vcmask 64512
        %v1711 = vsel %vm1710, %v1678, %v814
        %v1712 = vsel %vm1710, %v1679, %v816
        %v1713 = vsel %vm1710, %v1680, %v818
        %v1714 = vsel %vm1710, %v1681, %v820
        %v1715 = vsel %vm1710, %v1682, %v822
        %v1716 = vsel %vm1710, %v1683, %v824
        %v1717 = vsel %vm1710, %v1684, %v826
        %v1718 = vsel %vm1710, %v1685, %v828
        %v1719 = vsel %vm1710, %v1686, %v830
        %v1720 = vsel %vm1710, %v1687, %v832
        %v1721 = vsel %vm1710, %v1688, %v834
        %v1722 = vsel %vm1710, %v1689, %v836
        %v1723 = vsel %vm1710, %v1690, %v838
        %v1724 = vsel %vm1710, %v1691, %v840
        %v1725 = vsel %vm1710, %v1692, %v842
        %v1726 = vsel %vm1710, %v1693, %v844
        %v1727 = vsel %vm1710, %v1694, %v846
        %v1728 = vsel %vm1710, %v1695, %v848
        %v1729 = vsel %vm1710, %v1696, %v850
        %v1730 = vsel %vm1710, %v1697, %v852
        %v1731 = vsel %vm1710, %v1698, %v854
        %v1732 = vsel %vm1710, %v1699, %v856
        %v1733 = vsel %vm1710, %v1700, %v858
        %v1734 = vsel %vm1710, %v1701, %v860
        %v1735 = vsel %vm1710, %v1702, %v862
        %v1736 = vsel %vm1710, %v1703, %v864
        %v1737 = vsel %vm1710, %v1704, %v866
        %v1738 = vsel %vm1710, %v1705, %v868
        %v1739 = vsel %vm1710, %v1706, %v870
        %v1740 = vsel %vm1710, %v1707, %v872
        %v1741 = vsel %vm1710, %v1708, %v874
        %v1742 = vsel %vm1710, %v1709, %v876
        %vm1743 = vcmask 97280
        %v1744 = vsel %vm1743, %v1711, %v942
        %v1745 = vsel %vm1743, %v1712, %v944
        %v1746 = vsel %vm1743, %v1713, %v946
        %v1747 = vsel %vm1743, %v1714, %v948
        %v1748 = vsel %vm1743, %v1715, %v950
        %v1749 = vsel %vm1743, %v1716, %v952
        %v1750 = vsel %vm1743, %v1717, %v954
        %v1751 = vsel %vm1743, %v1718, %v956
        %v1752 = vsel %vm1743, %v1719, %v958
        %v1753 = vsel %vm1743, %v1720, %v960
        %v1754 = vsel %vm1743, %v1721, %v962
        %v1755 = vsel %vm1743, %v1722, %v964
        %v1756 = vsel %vm1743, %v1723, %v966
        %v1757 = vsel %vm1743, %v1724, %v968
        %v1758 = vsel %vm1743, %v1725, %v970
        %v1759 = vsel %vm1743, %v1726, %v972
        %v1760 = vsel %vm1743, %v1727, %v974
        %v1761 = vsel %vm1743, %v1728, %v976
        %v1762 = vsel %vm1743, %v1729, %v978
        %v1763 = vsel %vm1743, %v1730, %v980
        %v1764 = vsel %vm1743, %v1731, %v982
        %v1765 = vsel %vm1743, %v1732, %v984
        %v1766 = vsel %vm1743, %v1733, %v986
        %v1767 = vsel %vm1743, %v1734, %v988
        %v1768 = vsel %vm1743, %v1735, %v990
        %v1769 = vsel %vm1743, %v1736, %v992
        %v1770 = vsel %vm1743, %v1737, %v994
        %v1771 = vsel %vm1743, %v1738, %v996
        %v1772 = vsel %vm1743, %v1739, %v998
        %v1773 = vsel %vm1743, %v1740, %v1000
        %v1774 = vsel %vm1743, %v1741, %v1002
        %v1775 = vsel %vm1743, %v1742, %v1004
        %vm1776 = vcmask 130048
        %v1777 = vsel %vm1776, %v1744, %v1070
        %v1778 = vsel %vm1776, %v1745, %v1072
        %v1779 = vsel %vm1776, %v1746, %v1074
        %v1780 = vsel %vm1776, %v1747, %v1076
        %v1781 = vsel %vm1776, %v1748, %v1078
        %v1782 = vsel %vm1776, %v1749, %v1080
        %v1783 = vsel %vm1776, %v1750, %v1082
        %v1784 = vsel %vm1776, %v1751, %v1084
        %v1785 = vsel %vm1776, %v1752, %v1086
        %v1786 = vsel %vm1776, %v1753, %v1088
        %v1787 = vsel %vm1776, %v1754, %v1090
        %v1788 = vsel %vm1776, %v1755, %v1092
        %v1789 = vsel %vm1776, %v1756, %v1094
        %v1790 = vsel %vm1776, %v1757, %v1096
        %v1791 = vsel %vm1776, %v1758, %v1098
        %v1792 = vsel %vm1776, %v1759, %v1100
        %v1793 = vsel %vm1776, %v1760, %v1102
        %v1794 = vsel %vm1776, %v1761, %v1104
        %v1795 = vsel %vm1776, %v1762, %v1106
        %v1796 = vsel %vm1776, %v1763, %v1108
        %v1797 = vsel %vm1776, %v1764, %v1110
        %v1798 = vsel %vm1776, %v1765, %v1112
        %v1799 = vsel %vm1776, %v1766, %v1114
        %v1800 = vsel %vm1776, %v1767, %v1116
        %v1801 = vsel %vm1776, %v1768, %v1118
        %v1802 = vsel %vm1776, %v1769, %v1120
        %v1803 = vsel %vm1776, %v1770, %v1122
        %v1804 = vsel %vm1776, %v1771, %v1124
        %v1805 = vsel %vm1776, %v1772, %v1126
        %v1806 = vsel %vm1776, %v1773, %v1128
        %v1807 = vsel %vm1776, %v1774, %v1130
        %v1808 = vsel %vm1776, %v1775, %v1132
        %vm1809 = vcmask 162816
        %v1810 = vsel %vm1809, %v1777, %v1198
        %v1811 = vsel %vm1809, %v1778, %v1200
        %v1812 = vsel %vm1809, %v1779, %v1202
        %v1813 = vsel %vm1809, %v1780, %v1204
        %v1814 = vsel %vm1809, %v1781, %v1206
        %v1815 = vsel %vm1809, %v1782, %v1208
        %v1816 = vsel %vm1809, %v1783, %v1210
        %v1817 = vsel %vm1809, %v1784, %v1212
        %v1818 = vsel %vm1809, %v1785, %v1214
        %v1819 = vsel %vm1809, %v1786, %v1216
        %v1820 = vsel %vm1809, %v1787, %v1218
        %v1821 = vsel %vm1809, %v1788, %v1220
        %v1822 = vsel %vm1809, %v1789, %v1222
        %v1823 = vsel %vm1809, %v1790, %v1224
        %v1824 = vsel %vm1809, %v1791, %v1226
        %v1825 = vsel %vm1809, %v1792, %v1228
        %v1826 = vsel %vm1809, %v1793, %v1230
        %v1827 = vsel %vm1809, %v1794, %v1232
        %v1828 = vsel %vm1809, %v1795, %v1234
        %v1829 = vsel %vm1809, %v1796, %v1236
        %v1830 = vsel %vm1809, %v1797, %v1238
        %v1831 = vsel %vm1809, %v1798, %v1240
        %v1832 = vsel %vm1809, %v1799, %v1242
        %v1833 = vsel %vm1809, %v1800, %v1244
        %v1834 = vsel %vm1809, %v1801, %v1246
        %v1835 = vsel %vm1809, %v1802, %v1248
        %v1836 = vsel %vm1809, %v1803, %v1250
        %v1837 = vsel %vm1809, %v1804, %v1252
        %v1838 = vsel %vm1809, %v1805, %v1254
        %v1839 = vsel %vm1809, %v1806, %v1256
        %v1840 = vsel %vm1809, %v1807, %v1258
        %v1841 = vsel %vm1809, %v1808, %v1260
        %vm1842 = vcmask 195584
        %v1843 = vsel %vm1842, %v1810, %v1326
        %v1844 = vsel %vm1842, %v1811, %v1328
        %v1845 = vsel %vm1842, %v1812, %v1330
        %v1846 = vsel %vm1842, %v1813, %v1332
        %v1847 = vsel %vm1842, %v1814, %v1334
        %v1848 = vsel %vm1842, %v1815, %v1336
        %v1849 = vsel %vm1842, %v1816, %v1338
        %v1850 = vsel %vm1842, %v1817, %v1340
        %v1851 = vsel %vm1842, %v1818, %v1342
        %v1852 = vsel %vm1842, %v1819, %v1344
        %v1853 = vsel %vm1842, %v1820, %v1346
        %v1854 = vsel %vm1842, %v1821, %v1348
        %v1855 = vsel %vm1842, %v1822, %v1350
        %v1856 = vsel %vm1842, %v1823, %v1352
        %v1857 = vsel %vm1842, %v1824, %v1354
        %v1858 = vsel %vm1842, %v1825, %v1356
        %v1859 = vsel %vm1842, %v1826, %v1358
        %v1860 = vsel %vm1842, %v1827, %v1360
        %v1861 = vsel %vm1842, %v1828, %v1362
        %v1862 = vsel %vm1842, %v1829, %v1364
        %v1863 = vsel %vm1842, %v1830, %v1366
        %v1864 = vsel %vm1842, %v1831, %v1368
        %v1865 = vsel %vm1842, %v1832, %v1370
        %v1866 = vsel %vm1842, %v1833, %v1372
        %v1867 = vsel %vm1842, %v1834, %v1374
        %v1868 = vsel %vm1842, %v1835, %v1376
        %v1869 = vsel %vm1842, %v1836, %v1378
        %v1870 = vsel %vm1842, %v1837, %v1380
        %v1871 = vsel %vm1842, %v1838, %v1382
        %v1872 = vsel %vm1842, %v1839, %v1384
        %v1873 = vsel %vm1842, %v1840, %v1386
        %v1874 = vsel %vm1842, %v1841, %v1388
        %vm1875 = vcmask 228352
        %v1876 = vsel %vm1875, %v1843, %v1454
        %v1877 = vsel %vm1875, %v1844, %v1456
        %v1878 = vsel %vm1875, %v1845, %v1458
        %v1879 = vsel %vm1875, %v1846, %v1460
        %v1880 = vsel %vm1875, %v1847, %v1462
        %v1881 = vsel %vm1875, %v1848, %v1464
        %v1882 = vsel %vm1875, %v1849, %v1466
        %v1883 = vsel %vm1875, %v1850, %v1468
        %v1884 = vsel %vm1875, %v1851, %v1470
        %v1885 = vsel %vm1875, %v1852, %v1472
        %v1886 = vsel %vm1875, %v1853, %v1474
        %v1887 = vsel %vm1875, %v1854, %v1476
        %v1888 = vsel %vm1875, %v1855, %v1478
        %v1889 = vsel %vm1875, %v1856, %v1480
        %v1890 = vsel %vm1875, %v1857, %v1482
        %v1891 = vsel %vm1875, %v1858, %v1484
        %v1892 = vsel %vm1875, %v1859, %v1486
        %v1893 = vsel %vm1875, %v1860, %v1488
        %v1894 = vsel %vm1875, %v1861, %v1490
        %v1895 = vsel %vm1875, %v1862, %v1492
        %v1896 = vsel %vm1875, %v1863, %v1494
        %v1897 = vsel %vm1875, %v1864, %v1496
        %v1898 = vsel %vm1875, %v1865, %v1498
        %v1899 = vsel %vm1875, %v1866, %v1500
        %v1900 = vsel %vm1875, %v1867, %v1502
        %v1901 = vsel %vm1875, %v1868, %v1504
        %v1902 = vsel %vm1875, %v1869, %v1506
        %v1903 = vsel %vm1875, %v1870, %v1508
        %v1904 = vsel %vm1875, %v1871, %v1510
        %v1905 = vsel %vm1875, %v1872, %v1512
        %v1906 = vsel %vm1875, %v1873, %v1514
        %v1907 = vsel %vm1875, %v1874, %v1516
        %vm1908 = vcmask 261120
        %v1909 = vsel %vm1908, %v1876, %v1582
        %v1910 = vsel %vm1908, %v1877, %v1584
        %v1911 = vsel %vm1908, %v1878, %v1586
        %v1912 = vsel %vm1908, %v1879, %v1588
        %v1913 = vsel %vm1908, %v1880, %v1590
        %v1914 = vsel %vm1908, %v1881, %v1592
        %v1915 = vsel %vm1908, %v1882, %v1594
        %v1916 = vsel %vm1908, %v1883, %v1596
        %v1917 = vsel %vm1908, %v1884, %v1598
        %v1918 = vsel %vm1908, %v1885, %v1600
        %v1919 = vsel %vm1908, %v1886, %v1602
        %v1920 = vsel %vm1908, %v1887, %v1604
        %v1921 = vsel %vm1908, %v1888, %v1606
        %v1922 = vsel %vm1908, %v1889, %v1608
        %v1923 = vsel %vm1908, %v1890, %v1610
        %v1924 = vsel %vm1908, %v1891, %v1612
        %v1925 = vsel %vm1908, %v1892, %v1614
        %v1926 = vsel %vm1908, %v1893, %v1616
        %v1927 = vsel %vm1908, %v1894, %v1618
        %v1928 = vsel %vm1908, %v1895, %v1620
        %v1929 = vsel %vm1908, %v1896, %v1622
        %v1930 = vsel %vm1908, %v1897, %v1624
        %v1931 = vsel %vm1908, %v1898, %v1626
        %v1932 = vsel %vm1908, %v1899, %v1628
        %v1933 = vsel %vm1908, %v1900, %v1630
        %v1934 = vsel %vm1908, %v1901, %v1632
        %v1935 = vsel %vm1908, %v1902, %v1634
        %v1936 = vsel %vm1908, %v1903, %v1636
        %v1937 = vsel %vm1908, %v1904, %v1638
        %v1938 = vsel %vm1908, %v1905, %v1640
        %v1939 = vsel %vm1908, %v1906, %v1642
        %v1940 = vsel %vm1908, %v1907, %v1644
        %v1941 = vld [vmem:[#allocation6] sm:$0xff]
        %v1942 = vld [vmem:[#allocation6 + $0x8] sm:$0xff]
        %v1943 = vld [vmem:[#allocation6 + $0x10] sm:$0xff]
        %v1944 = vld [vmem:[#allocation6 + $0x18] sm:$0xff]
        %v1945 = vld [vmem:[#allocation6 + $0x20] sm:$0xf]
        %v1946 = vld [vmem:[#allocation8] sm:$0x1]
        %v1948 = vlaneseq
        %v1949 = vshrl.u32 %v1948, 7
        %v1950 = vsub.s32 0, %v1949
        %v1951 = vrot.slane %v1946, %v1950
        %vm1953 = vcmask 293888
        %v1955 = vsel %vm1953, %v1909, 0
        %v1958 = vsel %vm1953, %v1910, 0
        %v1961 = vsel %vm1953, %v1911, 0
        %v1964 = vsel %vm1953, %v1912, 0
        %v1967 = vsel %vm1953, %v1913, 0
        %v1970 = vsel %vm1953, %v1914, 0
        %v1973 = vsel %vm1953, %v1915, 0
        %v1976 = vsel %vm1953, %v1916, 0
        %v1979 = vsel %vm1953, %v1917, 0
        %v1982 = vsel %vm1953, %v1918, 0
        %v1985 = vsel %vm1953, %v1919, 0
        %v1988 = vsel %vm1953, %v1920, 0
        %v1991 = vsel %vm1953, %v1921, 0
        %v1994 = vsel %vm1953, %v1922, 0
        %v1997 = vsel %vm1953, %v1923, 0
        %v2000 = vsel %vm1953, %v1924, 0
        %v2003 = vsel %vm1953, %v1925, 0
        %v2006 = vsel %vm1953, %v1926, 0
        %v2009 = vsel %vm1953, %v1927, 0
        %v2012 = vsel %vm1953, %v1928, 0
        %v2015 = vsel %vm1953, %v1929, 0
        %v2018 = vsel %vm1953, %v1930, 0
        %v2021 = vsel %vm1953, %v1931, 0
        %v2024 = vsel %vm1953, %v1932, 0
        %v2027 = vsel %vm1953, %v1933, 0
        %v2030 = vsel %vm1953, %v1934, 0
        %v2033 = vsel %vm1953, %v1935, 0
        %v2036 = vsel %vm1953, %v1936, 0
        %v2039 = vsel %vm1953, %v1937, 0
        %v2042 = vsel %vm1953, %v1938, 0
        %v2045 = vsel %vm1953, %v1939, 0
        %v2048 = vsel %vm1953, %v1940, 0
        %vm2050 = vcmask 1043456
        %v2052 = vsel %vm2050, %v1945, 0
        %2054 = vmatprep.subr.mxu0 0.0
        %2055 = vmatpush1.msra.mxu0 %v1941
        %2056 = vmatprep.subr.mxu0 0.0
        %2057 = vmatpush1.msra.mxu0 %v1942
        %2058 = vmatprep.subr.mxu0 0.0
        %2059 = vmatpush1.msra.mxu0 %v1943
        %2060 = vmatprep.subr.mxu0 0.0
        %2061 = vmatpush1.msra.mxu0 %v1944
        %2062 = vmatprep.subr.mxu0 0.0
        %2063 = vmatpush1.msra.mxu0 %v2052
        %2064 = vmatprep.subr.mxu0 0.0
        %2065 = vmatpush1.msra.mxu0 0.0
        %2066 = vmatprep.subr.mxu0 0.0
        %2067 = vmatpush1.msra.mxu0 0.0
        %2068 = vmatprep.subr.mxu0 0.0
        %2069 = vmatpush1.msra.mxu0 0.0
        %2070 = vmatprep.subr.mxu0 0.0
        %2071 = vmatpush1.msra.mxu0 0.0
        %2072 = vmatprep.subr.mxu0 0.0
        %2073 = vmatpush1.msra.mxu0 0.0
        %2074 = vmatprep.subr.mxu0 0.0
        %2075 = vmatpush1.msra.mxu0 0.0
        %2076 = vmatprep.subr.mxu0 0.0
        %2077 = vmatpush1.msra.mxu0 0.0
        %2078 = vmatprep.subr.mxu0 0.0
        %2079 = vmatpush1.msra.mxu0 0.0
        %2080 = vmatprep.subr.mxu0 0.0
        %2081 = vmatpush1.msra.mxu0 0.0
        %2082 = vmatprep.subr.mxu0 0.0
        %2083 = vmatpush1.msra.mxu0 0.0
        %2084 = vmatprep.subr.mxu0 0.0
        %2085 = vmatpush1.msra.mxu0 0.0
        %2086 = vmatprep.subr.mxu0 0.0
        %2087 = vmatpush1.msra.mxu0 0.0
        %2088 = vmatprep.subr.mxu0 0.0
        %2089 = vmatpush1.msra.mxu0 0.0
        %2090 = vmatprep.subr.mxu0 0.0
        %2091 = vmatpush1.msra.mxu0 0.0
        %2092 = vmatprep.subr.mxu0 0.0
        %2093 = vmatpush1.msra.mxu0 0.0
        %2094 = vmatprep.subr.mxu0 0.0
        %2095 = vmatpush1.msra.mxu0 0.0
        %2096 = vmatprep.subr.mxu0 0.0
        %2097 = vmatpush1.msra.mxu0 0.0
        %2098 = vmatprep.subr.mxu0 0.0
        %2099 = vmatpush1.msra.mxu0 0.0
        %2100 = vmatprep.subr.mxu0 0.0
        %2101 = vmatpush1.msra.mxu0 0.0
        %2102 = vmatprep.subr.mxu0 0.0
        %2103 = vmatpush1.msra.mxu0 0.0
        %2104 = vmatprep.subr.mxu0 0.0
        %2105 = vmatpush1.msra.mxu0 0.0
        %2106 = vmatprep.subr.mxu0 0.0
        %2107 = vmatpush1.msra.mxu0 0.0
        %2108 = vmatprep.subr.mxu0 0.0
        %2109 = vmatpush1.msra.mxu0 0.0
        %2110 = vmatprep.subr.mxu0 0.0
        %2111 = vmatpush1.msra.mxu0 0.0
        %2112 = vmatprep.subr.mxu0 0.0
        %2113 = vmatpush1.msra.mxu0 0.0
        %2114 = vmatprep.subr.mxu0 0.0
        %2115 = vmatpush1.msra.mxu0 0.0
        %2116 = vmatprep.subr.mxu0 0.0
        %2117 = vmatpush1.msra.mxu0 0.0
        %2118 = vmatprep.mubr.f32.mxu0 0.0
        %2119 = vmatmul.mubr.f32.gmra.mrb[0].mxu0 %v1955
        %v2120 = vpop.f32.mrb[0].mxu0
        %v2121 = vadd.f32 %v1951, %v2120
        %v2122 = vpop.f32.mrb[0].mxu0
        %2123 = vmatprep.mubr.f32.mxu0 0.0
        %2124 = vmatmul.mubr.f32.gmra.mrb[0].mxu0 %v1958
        %v2125 = vpop.f32.mrb[0].mxu0
        %v2126 = vadd.f32 %v1951, %v2125
        %v2127 = vpop.f32.mrb[0].mxu0
        %2128 = vmatprep.mubr.f32.mxu0 0.0
        %2129 = vmatmul.mubr.f32.gmra.mrb[0].mxu0 %v1961
        %v2130 = vpop.f32.mrb[0].mxu0
        %v2131 = vadd.f32 %v1951, %v2130
        %v2132 = vpop.f32.mrb[0].mxu0
        %2133 = vmatprep.mubr.f32.mxu0 0.0
        %2134 = vmatmul.mubr.f32.gmra.mrb[0].mxu0 %v1964
        %v2135 = vpop.f32.mrb[0].mxu0
        %v2136 = vadd.f32 %v1951, %v2135
        %v2137 = vpop.f32.mrb[0].mxu0
        %2138 = vmatprep.mubr.f32.mxu0 0.0
        %2139 = vmatmul.mubr.f32.gmra.mrb[0].mxu0 %v1967
        %v2140 = vpop.f32.mrb[0].mxu0
        %v2141 = vadd.f32 %v1951, %v2140
        %v2142 = vpop.f32.mrb[0].mxu0
        %2143 = vmatprep.mubr.f32.mxu0 0.0
        %2144 = vmatmul.mubr.f32.gmra.mrb[0].mxu0 %v1970
        %v2145 = vpop.f32.mrb[0].mxu0
        %v2146 = vadd.f32 %v1951, %v2145
        %v2147 = vpop.f32.mrb[0].mxu0
        %2148 = vmatprep.mubr.f32.mxu0 0.0
        %2149 = vmatmul.mubr.f32.gmra.mrb[0].mxu0 %v1973
        %v2150 = vpop.f32.mrb[0].mxu0
        %v2151 = vadd.f32 %v1951, %v2150
        %v2152 = vpop.f32.mrb[0].mxu0
        %2153 = vmatprep.mubr.f32.mxu0 0.0
        %2154 = vmatmul.mubr.f32.gmra.mrb[0].mxu0 %v1976
        %v2155 = vpop.f32.mrb[0].mxu0
        %v2156 = vadd.f32 %v1951, %v2155
        %v2157 = vpop.f32.mrb[0].mxu0
        %2158 = vmatprep.mubr.f32.mxu0 0.0
        %2159 = vmatmul.mubr.f32.gmra.mrb[0].mxu0 %v1979
        %v2160 = vpop.f32.mrb[0].mxu0
        %v2161 = vadd.f32 %v1951, %v2160
        %v2162 = vpop.f32.mrb[0].mxu0
        %2163 = vmatprep.mubr.f32.mxu0 0.0
        %2164 = vmatmul.mubr.f32.gmra.mrb[0].mxu0 %v1982
        %v2165 = vpop.f32.mrb[0].mxu0
        %v2166 = vadd.f32 %v1951, %v2165
        %v2167 = vpop.f32.mrb[0].mxu0
        %2168 = vmatprep.mubr.f32.mxu0 0.0
        %2169 = vmatmul.mubr.f32.gmra.mrb[0].mxu0 %v1985
        %v2170 = vpop.f32.mrb[0].mxu0
        %v2171 = vadd.f32 %v1951, %v2170
        %v2172 = vpop.f32.mrb[0].mxu0
        %2173 = vmatprep.mubr.f32.mxu0 0.0
        %2174 = vmatmul.mubr.f32.gmra.mrb[0].mxu0 %v1988
        %v2175 = vpop.f32.mrb[0].mxu0
        %v2176 = vadd.f32 %v1951, %v2175
        %v2177 = vpop.f32.mrb[0].mxu0
        %2178 = vmatprep.mubr.f32.mxu0 0.0
        %2179 = vmatmul.mubr.f32.gmra.mrb[0].mxu0 %v1991
        %v2180 = vpop.f32.mrb[0].mxu0
        %v2181 = vadd.f32 %v1951, %v2180
        %v2182 = vpop.f32.mrb[0].mxu0
        %2183 = vmatprep.mubr.f32.mxu0 0.0
        %2184 = vmatmul.mubr.f32.gmra.mrb[0].mxu0 %v1994
        %v2185 = vpop.f32.mrb[0].mxu0
        %v2186 = vadd.f32 %v1951, %v2185
        %v2187 = vpop.f32.mrb[0].mxu0
        %2188 = vmatprep.mubr.f32.mxu0 0.0
        %2189 = vmatmul.mubr.f32.gmra.mrb[0].mxu0 %v1997
        %v2190 = vpop.f32.mrb[0].mxu0
        %v2191 = vadd.f32 %v1951, %v2190
        %v2192 = vpop.f32.mrb[0].mxu0
        %2193 = vmatprep.mubr.f32.mxu0 0.0
        %2194 = vmatmul.mubr.f32.gmra.mrb[0].mxu0 %v2000
        %v2195 = vpop.f32.mrb[0].mxu0
        %v2196 = vadd.f32 %v1951, %v2195
        %v2197 = vpop.f32.mrb[0].mxu0
        %2198 = vmatprep.mubr.f32.mxu0 0.0
        %2199 = vmatmul.mubr.f32.gmra.mrb[0].mxu0 %v2003
        %v2200 = vpop.f32.mrb[0].mxu0
        %v2201 = vadd.f32 %v1951, %v2200
        %v2202 = vpop.f32.mrb[0].mxu0
        %2203 = vmatprep.mubr.f32.mxu0 0.0
        %2204 = vmatmul.mubr.f32.gmra.mrb[0].mxu0 %v2006
        %v2205 = vpop.f32.mrb[0].mxu0
        %v2206 = vadd.f32 %v1951, %v2205
        %v2207 = vpop.f32.mrb[0].mxu0
        %2208 = vmatprep.mubr.f32.mxu0 0.0
        %2209 = vmatmul.mubr.f32.gmra.mrb[0].mxu0 %v2009
        %v2210 = vpop.f32.mrb[0].mxu0
        %v2211 = vadd.f32 %v1951, %v2210
        %v2212 = vpop.f32.mrb[0].mxu0
        %2213 = vmatprep.mubr.f32.mxu0 0.0
        %2214 = vmatmul.mubr.f32.gmra.mrb[0].mxu0 %v2012
        %v2215 = vpop.f32.mrb[0].mxu0
        %v2216 = vadd.f32 %v1951, %v2215
        %v2217 = vpop.f32.mrb[0].mxu0
        %2218 = vmatprep.mubr.f32.mxu0 0.0
        %2219 = vmatmul.mubr.f32.gmra.mrb[0].mxu0 %v2015
        %v2220 = vpop.f32.mrb[0].mxu0
        %v2221 = vadd.f32 %v1951, %v2220
        %v2222 = vpop.f32.mrb[0].mxu0
        %2223 = vmatprep.mubr.f32.mxu0 0.0
        %2224 = vmatmul.mubr.f32.gmra.mrb[0].mxu0 %v2018
        %v2225 = vpop.f32.mrb[0].mxu0
        %v2226 = vadd.f32 %v1951, %v2225
        %v2227 = vpop.f32.mrb[0].mxu0
        %2228 = vmatprep.mubr.f32.mxu0 0.0
        %2229 = vmatmul.mubr.f32.gmra.mrb[0].mxu0 %v2021
        %v2230 = vpop.f32.mrb[0].mxu0
        %v2231 = vadd.f32 %v1951, %v2230
        %v2232 = vpop.f32.mrb[0].mxu0
        %2233 = vmatprep.mubr.f32.mxu0 0.0
        %2234 = vmatmul.mubr.f32.gmra.mrb[0].mxu0 %v2024
        %v2235 = vpop.f32.mrb[0].mxu0
        %v2236 = vadd.f32 %v1951, %v2235
        %v2237 = vpop.f32.mrb[0].mxu0
        %2238 = vmatprep.mubr.f32.mxu0 0.0
        %2239 = vmatmul.mubr.f32.gmra.mrb[0].mxu0 %v2027
        %v2240 = vpop.f32.mrb[0].mxu0
        %v2241 = vadd.f32 %v1951, %v2240
        %v2242 = vpop.f32.mrb[0].mxu0
        %2243 = vmatprep.mubr.f32.mxu0 0.0
        %2244 = vmatmul.mubr.f32.gmra.mrb[0].mxu0 %v2030
        %v2245 = vpop.f32.mrb[0].mxu0
        %v2246 = vadd.f32 %v1951, %v2245
        %v2247 = vpop.f32.mrb[0].mxu0
        %2248 = vmatprep.mubr.f32.mxu0 0.0
        %2249 = vmatmul.mubr.f32.gmra.mrb[0].mxu0 %v2033
        %v2250 = vpop.f32.mrb[0].mxu0
        %v2251 = vadd.f32 %v1951, %v2250
        %v2252 = vpop.f32.mrb[0].mxu0
        %2253 = vmatprep.mubr.f32.mxu0 0.0
        %2254 = vmatmul.mubr.f32.gmra.mrb[0].mxu0 %v2036
        %v2255 = vpop.f32.mrb[0].mxu0
        %v2256 = vadd.f32 %v1951, %v2255
        %v2257 = vpop.f32.mrb[0].mxu0
        %2258 = vmatprep.mubr.f32.mxu0 0.0
        %2259 = vmatmul.mubr.f32.gmra.mrb[0].mxu0 %v2039
        %v2260 = vpop.f32.mrb[0].mxu0
        %v2261 = vadd.f32 %v1951, %v2260
        %v2262 = vpop.f32.mrb[0].mxu0
        %2263 = vmatprep.mubr.f32.mxu0 0.0
        %2264 = vmatmul.mubr.f32.gmra.mrb[0].mxu0 %v2042
        %v2265 = vpop.f32.mrb[0].mxu0
        %v2266 = vadd.f32 %v1951, %v2265
        %v2267 = vpop.f32.mrb[0].mxu0
        %2268 = vmatprep.mubr.f32.mxu0 0.0
        %2269 = vmatmul.mubr.f32.gmra.mrb[0].mxu0 %v2045
        %v2270 = vpop.f32.mrb[0].mxu0
        %v2271 = vadd.f32 %v1951, %v2270
        %v2272 = vpop.f32.mrb[0].mxu0
        %2273 = vmatprep.mubr.f32.mxu0 0.0
        %2274 = vmatmul.mubr.f32.gmra.mrb[0].mxu0 %v2048
        %v2275 = vpop.f32.mrb[0].mxu0
        %v2276 = vadd.f32 %v1951, %v2275
        %v2277 = vpop.f32.mrb[0].mxu0
        %2278 = vdwg.mxu0
        %2279 = vst.msk [vmem:[%s229] sm:$0xff] %vm1710, %v2121
        %2280 = vst.msk [vmem:[%s229 + $0x8] sm:$0xff] %vm1710, %v2126
        %2281 = vst.msk [vmem:[%s229 + $0x10] sm:$0xff] %vm1710, %v2131
        %2282 = vst.msk [vmem:[%s229 + $0x18] sm:$0xff] %vm1710, %v2136
        %2283 = vst.msk [vmem:[%s229 + $0x20] sm:$0xff] %vm1710, %v2141
        %2284 = vst.msk [vmem:[%s229 + $0x28] sm:$0xff] %vm1710, %v2146
        %2285 = vst.msk [vmem:[%s229 + $0x30] sm:$0xff] %vm1710, %v2151
        %2286 = vst.msk [vmem:[%s229 + $0x38] sm:$0xff] %vm1710, %v2156
        %2287 = vst.msk [vmem:[%s229 + $0x40] sm:$0xff] %vm1710, %v2161
        %2288 = vst.msk [vmem:[%s229 + $0x48] sm:$0xff] %vm1710, %v2166
        %2289 = vst.msk [vmem:[%s229 + $0x50] sm:$0xff] %vm1710, %v2171
        %2290 = vst.msk [vmem:[%s229 + $0x58] sm:$0xff] %vm1710, %v2176
        %2291 = vst.msk [vmem:[%s229 + $0x60] sm:$0xff] %vm1710, %v2181
        %2292 = vst.msk [vmem:[%s229 + $0x68] sm:$0xff] %vm1710, %v2186
        %2293 = vst.msk [vmem:[%s229 + $0x70] sm:$0xff] %vm1710, %v2191
        %2294 = vst.msk [vmem:[%s229 + $0x78] sm:$0xff] %vm1710, %v2196
        %2295 = vst.msk [vmem:[%s229 + $0x80] sm:$0xff] %vm1710, %v2201
        %2296 = vst.msk [vmem:[%s229 + $0x88] sm:$0xff] %vm1710, %v2206
        %2297 = vst.msk [vmem:[%s229 + $0x90] sm:$0xff] %vm1710, %v2211
        %2298 = vst.msk [vmem:[%s229 + $0x98] sm:$0xff] %vm1710, %v2216
        %2299 = vst.msk [vmem:[%s229 + $0xa0] sm:$0xff] %vm1710, %v2221
        %2300 = vst.msk [vmem:[%s229 + $0xa8] sm:$0xff] %vm1710, %v2226
        %2301 = vst.msk [vmem:[%s229 + $0xb0] sm:$0xff] %vm1710, %v2231
        %2302 = vst.msk [vmem:[%s229 + $0xb8] sm:$0xff] %vm1710, %v2236
        %2303 = vst.msk [vmem:[%s229 + $0xc0] sm:$0xff] %vm1710, %v2241
        %2304 = vst.msk [vmem:[%s229 + $0xc8] sm:$0xff] %vm1710, %v2246
        %2305 = vst.msk [vmem:[%s229 + $0xd0] sm:$0xff] %vm1710, %v2251
        %2306 = vst.msk [vmem:[%s229 + $0xd8] sm:$0xff] %vm1710, %v2256
        %2307 = vst.msk [vmem:[%s229 + $0xe0] sm:$0xff] %vm1710, %v2261
        %2308 = vst.msk [vmem:[%s229 + $0xe8] sm:$0xff] %vm1710, %v2266
        %2309 = vst.msk [vmem:[%s229 + $0xf0] sm:$0xff] %vm1710, %v2271
        %2310 = vst.msk [vmem:[%s229 + $0xf8] sm:$0xff] %vm1710, %v2276
        %s2311 = sand.u32 %s111, 1
        %s2312 = scalar_lea.sflag [#allocation5], %s2311
        %s2313 = sand.u32 %s111, 1
        %s2314 = smul.addr %s2313, 256
        %s2315 = scalar_lea.vmem [#allocation9], %s2314
        // Predicated region
        $region49: #{tpu_custom_call.1} parent=31 // pred_check
          %p2316 = pneg %p121
        $region50: #{tpu_custom_call.1} parent=31 // pred_check_branch
          %2318 = sbr.rel (%p2316) target = $region52
        $region51: #{tpu_custom_call.1} parent=31 // pred_region
          %s2319 = smul.u32 32, %s26
          %s2321 = ssub.s32 4096, 4096
          %2322 = vsyncadd %s2312, %s2321
          %s2323 = smul.addr %s25, 32
          %s2324 = sadd.s32 %s2319, %s2323
          %s2325 = smul.addr %s2324, 128
          %s2326 = scalar_lea.hbm %s3, %s2325
          %s2327 = sshll.u32 %s2315, 4
          %s2328 = int_to_ptr.vmem [resolvable:$true] %s2327
          %2333 = dma.vmem_to_hbm [thread:$0]  %s2328, 4096, %s2326, %s2312, 128, 128, 8
        $region52: #{tpu_custom_call.1} parent=31 // pred_fallthru
          _
      $region32: #{tpu_custom_call.1} parent=5 // pred_fallthru
        _
      %p2334 = scmp.le.s32.totalorder 2, %s16
      // Predicated region
      $region53: #{tpu_custom_call.1} parent=5 // pred_check
        %p2335 = pneg %p2334
      $region54: #{tpu_custom_call.1} parent=5 // pred_check_branch
        %2337 = sbr.rel (%p2335) target = $region56
      $region55: #{tpu_custom_call.1} parent=5 // pred_region
        %s2338 = ssub.s32 %s16, 2
        // Predicated region
        $region57: #{tpu_custom_call.1} parent=55 // pred_check
          %p2339 = pneg %p127
        $region58: #{tpu_custom_call.1} parent=55 // pred_check_branch
          %2341 = sbr.rel (%p2339) target = $region60
        $region59: #{tpu_custom_call.1} parent=55 // pred_region
          %s2342 = sand.u32 %s112, 1
          %s2343 = scalar_lea.sflag [#allocation5], %s2342
          %s2344 = sand.u32 %s112, 1
          %s2345 = smul.addr %s2344, 256
          %s2346 = scalar_lea.vmem [#allocation9], %s2345
          %2347 = dma.done %s2343, 4096
        $region60: #{tpu_custom_call.1} parent=55 // pred_fallthru
          _
      $region56: #{tpu_custom_call.1} parent=5 // pred_fallthru
        _
    $region6: #{tpu_custom_call.1} parent=1 // loop_footer
      %s20 = sadd.s32 1, %s16
    $region7: #{tpu_custom_call.1} parent=1 // loop_footer_branch
      %15 = sbr.rel target = $region3
    $region8: #{tpu_custom_call.1} parent=1 // loop_exit
      _
    %2348 = vsyncpa [#allocation4], 1
    %s2349 = scalar_lea.sflag [#allocation4], 1
    %2350 = vsyncpa %s2349, 1
    %2351 = vsyncpa [#allocation7], 1
    %2352 = vsyncpa [#allocation5], 1
    %s2353 = scalar_lea.sflag [#allocation5], 1
    %2354 = vsyncpa %s2353, 1

</llo_original>
